<compile_context>
chip_gen: v5e
topology: v5e:2x2
jax: 0.10.0
libtpu: 0.0.40
codegen_flags: <defaults>
</compile_context>

<pallas_src>
from functools import partial

import jax
import jax.numpy as jnp
from jax.experimental import pallas as pl
from jax.experimental.pallas import tpu as pltpu

EPS = 1e-5


# ----------------------------------------------------------------------------------
# in-kernel helpers
# ----------------------------------------------------------------------------------
def _conv3x3_taps(window_fn, w_ref, bias):
    """3x3 conv (padding=1) as 9 accumulating MXU matmuls with lane-aligned operands.
    window_fn(kh, kw) -> (M, Cin) operand in compute dtype; w_ref: (9, Cin, Cout) ref;
    bias: (1, Cout) f32.  Returns (M, Cout) f32 (f32 accumulation on the MXU)."""
    acc = None
    for kh in range(3):
        for kw in range(3):
            d = jnp.dot(window_fn(kh, kw), w_ref[kh * 3 + kw],
                        preferred_element_type=jnp.float32)
            acc = d if acc is None else acc + d
    return acc + bias


def _tile_stats(vals_f32, count):
    """Per-tile BN partials about the tile mean (Chan-mergeable): (sum, M2), both (1, C)."""
    s = jnp.sum(vals_f32, axis=0, keepdims=True)
    mu = s * (1.0 / count)
    m2 = jnp.sum((vals_f32 - mu) ** 2, axis=0, keepdims=True)
    return s, m2


# ----------------------------------------------------------------------------------
# kernels
# ----------------------------------------------------------------------------------
def _conv1_stats_kernel(xpad_ref, w_ref, b_ref, y_ref, sum_ref, m2_ref, *, TN, H, W):
    """conv1 (+bias) + per-tile BN1 partials.  Output stored as a 2-D (M, C) slab."""
    Cin = xpad_ref.shape[-1]
    C = w_ref.shape[-1]
    M = TN * H * W

    win = lambda kh, kw: xpad_ref[:, kh:kh + H, kw:kw + W, :].reshape(M, Cin)
    acc = _conv3x3_taps(win, w_ref, b_ref[...])            # (M, C) f32
    yv = acc.astype(y_ref.dtype)
    y_ref[...] = yv

    s, m2 = _tile_stats(yv.astype(jnp.float32), M)         # stats of the stored values
    sum_ref[...] = s.reshape(1, 1, C)
    m2_ref[...] = m2.reshape(1, 1, C)


def _bn_relu_conv2_stats_kernel(y1_ref, scale_ref, shift_ref, w_ref, b_ref,
                                y2_ref, sum_ref, m2_ref, *, TN, H, W):
    """BN1 (precomputed per-channel scale/shift) + ReLU + conv2 (+bias) + BN2 partials.
    No padded VMEM scratch: the zero halo is built as a value with two concatenates."""
    Cm = w_ref.shape[1]
    C = w_ref.shape[2]
    M = TN * H * W
    cdt = y1_ref.dtype

    a = jnp.maximum(
        y1_ref[...].astype(jnp.float32) * scale_ref[...] + shift_ref[...], 0.0
    ).astype(cdt).reshape(TN, H, W, Cm)

    zrow = jnp.zeros((TN, 1, W, Cm), cdt)
    zcol = jnp.zeros((TN, H + 2, 1, Cm), cdt)
    ap = jnp.concatenate(
        [zcol, jnp.concatenate([zrow, a, zrow], axis=1), zcol], axis=2)   # (TN,H+2,W+2,Cm)

    win = lambda kh, kw: ap[:, kh:kh + H, kw:kw + W, :].reshape(M, Cm)
    acc = _conv3x3_taps(win, w_ref, b_ref[...])            # (M, C) f32
    yv = acc.astype(y2_ref.dtype)
    y2_ref[...] = yv

    s, m2 = _tile_stats(yv.astype(jnp.float32), M)
    sum_ref[...] = s.reshape(1, 1, C)
    m2_ref[...] = m2.reshape(1, 1, C)


def _bn_relu_kernel(y_ref, scale_ref, shift_ref, o_ref):
    """BN2 + ReLU, pure elementwise on a (M, C) slab."""
    o_ref[...] = jnp.maximum(
        y_ref[...].astype(jnp.float32) * scale_ref[...] + shift_ref[...], 0.0
    ).astype(o_ref.dtype)


# ----------------------------------------------------------------------------------
# wrapper helpers
# ----------------------------------------------------------------------------------
def _vmem_capacity_bytes():
    """Generation-aware VMEM capacity (128 MiB v5e/v6e, 64 MiB per core v7x)."""
    try:
        cap = getattr(pltpu.get_tpu_info(), "vmem_capacity_bytes", None)
        if cap:
            return int(cap)
    except Exception:
        pass
    return 64 * 2**20   # conservative fallback (v7x per-TensorCore)


def _per_image_step_bytes(H, W, Cin, Cm, Cout, itemsize):
    """Per-batch-image VMEM bytes of one grid step: explicit 2x double-buffering for every
    tiled operand + in-kernel working set (padded activation, one tap window, f32 acc)."""
    Hp, Wp = H + 2, W + 2
    p1 = 2 * (Hp * Wp * Cin + H * W * Cm) * itemsize \
        + H * W * Cin * itemsize + 4 * H * W * (Cin + Cm)
    p2 = 2 * (H * W * Cm + H * W * Cout) * itemsize \
        + (Hp * Wp * Cm + H * W * Cm) * itemsize + 4 * H * W * (Cm + Cout)
    p3 = 2 * H * W * Cout * (itemsize + 4)
    return max(p1, p2, p3)


def _pick_batch_tile(n, per_image_bytes, budget_bytes):
    """Largest batch tile dividing n that fits the budget and keeps >= 2 grid steps
    (>= 4 when the batch allows it, so v7x megacore gets >= 2 steps per TensorCore)."""
    best = 1
    for tn in range(1, n + 1):
        if n % tn:
            continue
        if tn * per_image_bytes > budget_bytes:
            continue
        steps = n // tn
        if n >= 4 and steps < 4:
            continue
        if n >= 2 and steps < 2:
            continue
        best = tn
    return best


def _bn_scale_shift(sums, m2s, m_tile, m_total, gamma, beta):
    """Chan-merge per-tile (sum, M2) partials and fold training-mode BatchNorm
    (biased variance, eps=1e-5) into per-channel scale/shift: y_norm = y*scale + shift."""
    C = sums.shape[-1]
    s = sums.reshape(-1, C).astype(jnp.float32)            # (nt, C)
    m2 = m2s.reshape(-1, C).astype(jnp.float32)
    mu_i = s / m_tile
    mu = jnp.sum(s, axis=0) / m_total                      # (C,)
    var = (jnp.sum(m2, axis=0) + m_tile * jnp.sum((mu_i - mu) ** 2, axis=0)) / m_total
    var = jnp.maximum(var, 0.0)
    scale = gamma.reshape(-1).astype(jnp.float32) * jax.lax.rsqrt(var + EPS)
    shift = beta.reshape(-1).astype(jnp.float32) - mu * scale
    return scale.reshape(1, C), shift.reshape(1, C)


# ----------------------------------------------------------------------------------
# DoubleConv forward
# ----------------------------------------------------------------------------------
def double_conv(x_nchw, w1, b1, g1, be1, w2, b2, g2, be2, *,
                compute_dtype=jnp.bfloat16):
    """DoubleConv forward. x_nchw: (N, Cin, H, W); conv weights HWIO (3,3,Cin,Cout).
    compute_dtype feeds the MXU and the y1/y2 HBM intermediates (bf16 by default);
    conv accumulation and all BatchNorm statistics stay in f32.  Returns (N,Cout,H,W) f32."""
    N, Cin, H, W = x_nchw.shape
    Cm, Cout = w1.shape[3], w2.shape[3]
    Hp, Wp = H + 2, W + 2
    cdt = jnp.dtype(compute_dtype)
    it = cdt.itemsize
    f32 = jnp.float32

    # Input: NCHW -> padded NHWC in compute dtype (single fused XLA copy).
    # TODO(synk): fold this transpose+pad into pass 1 (in-kernel halo + NCHW relayout) to
    # drop one HBM round trip over the input when Cin is large.
    xpad = jnp.pad(jnp.transpose(x_nchw, (0, 2, 3, 1)).astype(cdt),
                   ((0, 0), (1, 1), (1, 1), (0, 0)))

    # Per-tap weight slabs (9, Cin, Cout): each tap is a lane-aligned (Cin, Cout) RHS.
    w1t = w1.reshape(9, Cin, Cm).astype(cdt)
    w2t = w2.reshape(9, Cm, Cout).astype(cdt)
    b1r = b1.reshape(1, Cm).astype(f32)
    b2r = b2.reshape(1, Cout).astype(f32)

    # ---- generation-aware batch tiling / VMEM budget ----
    cap = _vmem_capacity_bytes()
    wbytes = 2 * (int(w1t.size) + int(w2t.size)) * it + 8 * (Cm + Cout) * 4
    per_img = _per_image_step_bytes(H, W, Cin, Cm, Cout, it)
    # TODO(synk): if a single image exceeds the budget, add H-band tiling with a 1-row halo.
    TN = _pick_batch_tile(N, per_img, max(int(0.75 * cap) - wbytes, per_img))
    if (TN * H * W) % 8 and TN != N:
        TN = N   # keep the (M, C) block second-minor dim 8-aligned or full
    nt = N // TN
    grid = (nt,)
    vmem_limit = int(min(cap - 2 * 2**20,
                         max(32 * 2**20, TN * per_img + wbytes + 8 * 2**20)))
    # TODO(synk): single-buffer the constant weight/bias/scale operands
    # (pipeline_mode=pl.Buffered(1)) to reclaim VMEM for deep layers with large Cin/Cout.
    cparams = pltpu.CompilerParams(dimension_semantics=("parallel",),
                                   vmem_limit_bytes=vmem_limit)

    Mtot = N * H * W
    Mtile = TN * H * W

    # ---- pass 1: conv1 + BN1 partial statistics ----
    ce1 = pl.CostEstimate(
        flops=int(2 * Mtot * 9 * Cin * Cm), transcendentals=0,
        bytes_accessed=int((int(xpad.size) + Mtot * Cm + int(w1t.size)) * it))
    y1, s1, m21 = pl.pallas_call(
        partial(_conv1_stats_kernel, TN=TN, H=H, W=W),
        grid=grid,
        in_specs=[
            pl.BlockSpec((TN, Hp, Wp, Cin), lambda i: (i, 0, 0, 0)),
            pl.BlockSpec((9, Cin, Cm), lambda i: (0, 0, 0)),
            pl.BlockSpec((1, Cm), lambda i: (0, 0)),
        ],
        out_specs=(
            pl.BlockSpec((Mtile, Cm), lambda i: (i, 0)),
            pl.BlockSpec((1, 1, Cm), lambda i: (i, 0, 0)),
            pl.BlockSpec((1, 1, Cm), lambda i: (i, 0, 0)),
        ),
        out_shape=(
            jax.ShapeDtypeStruct((Mtot, Cm), cdt),
            jax.ShapeDtypeStruct((nt, 1, Cm), f32),
            jax.ShapeDtypeStruct((nt, 1, Cm), f32),
        ),
        compiler_params=cparams,
        cost_estimate=ce1,
    )(xpad, w1t, b1r)

    scale1, shift1 = _bn_scale_shift(s1, m21, Mtile, Mtot, g1, be1)

    # ---- pass 2: BN1 + ReLU -> conv2 + BN2 partial statistics ----
    ce2 = pl.CostEstimate(
        flops=int(2 * Mtot * 9 * Cm * Cout), transcendentals=0,
        bytes_accessed=int((Mtot * Cm + Mtot * Cout + int(w2t.size)) * it))
    y2, s2, m22 = pl.pallas_call(
        partial(_bn_relu_conv2_stats_kernel, TN=TN, H=H, W=W),
        grid=grid,
        in_specs=[
            pl.BlockSpec((Mtile, Cm), lambda i: (i, 0)),
            pl.BlockSpec((1, Cm), lambda i: (0, 0)),
            pl.BlockSpec((1, Cm), lambda i: (0, 0)),
            pl.BlockSpec((9, Cm, Cout), lambda i: (0, 0, 0)),
            pl.BlockSpec((1, Cout), lambda i: (0, 0)),
        ],
        out_specs=(
            pl.BlockSpec((Mtile, Cout), lambda i: (i, 0)),
            pl.BlockSpec((1, 1, Cout), lambda i: (i, 0, 0)),
            pl.BlockSpec((1, 1, Cout), lambda i: (i, 0, 0)),
        ),
        out_shape=(
            jax.ShapeDtypeStruct((Mtot, Cout), cdt),
            jax.ShapeDtypeStruct((nt, 1, Cout), f32),
            jax.ShapeDtypeStruct((nt, 1, Cout), f32),
        ),
        compiler_params=cparams,
        cost_estimate=ce2,
    )(y1, scale1, shift1, w2t, b2r)

    scale2, shift2 = _bn_scale_shift(s2, m22, Mtile, Mtot, g2, be2)

    # ---- pass 3: BN2 + ReLU (elementwise slab) ----
    ce3 = pl.CostEstimate(
        flops=int(3 * Mtot * Cout), transcendentals=0,
        bytes_accessed=int(Mtot * Cout * (it + 4)))
    out_flat = pl.pallas_call(
        _bn_relu_kernel,
        grid=grid,
        in_specs=[
            pl.BlockSpec((Mtile, Cout), lambda i: (i, 0)),
            pl.BlockSpec((1, Cout), lambda i: (0, 0)),
            pl.BlockSpec((1, Cout), lambda i: (0, 0)),
        ],
        out_specs=pl.BlockSpec((Mtile, Cout), lambda i: (i, 0)),
        out_shape=jax.ShapeDtypeStruct((Mtot, Cout), f32),
        compiler_params=cparams,
        cost_estimate=ce3,
    )(y2, scale2, shift2)

    # (N*H*W, Cout) slab -> NCHW (single fused XLA reshape+transpose).
    # TODO(synk): emit NCHW directly from pass 3 (in-kernel (H*W, C) transpose) to drop
    # this extra HBM pass over the output.
    return jnp.transpose(out_flat.reshape(N, H, W, Cout), (0, 3, 1, 2))


# ----------------------------------------------------------------------------------
# reference + test
# ----------------------------------------------------------------------------------
def _reference(x_nchw, w1, b1, g1, be1, w2, b2, g2, be2):
    """Pure-JAX reference (NHWC conv + training-mode BN + ReLU), all f32."""
    x = jnp.transpose(x_nchw, (0, 2, 3, 1))

    def block(x, w, b, g, be):
        y = jax.lax.conv_general_dilated(
            x, w, window_strides=(1, 1), padding=((1, 1), (1, 1)),
            dimension_numbers=("NHWC", "HWIO", "NHWC")) + b
        mean = jnp.mean(y, axis=(0, 1, 2), keepdims=True)
        var = jnp.mean((y - mean) ** 2, axis=(0, 1, 2), keepdims=True)
        y = (y - mean) * jax.lax.rsqrt(var + EPS) * g + be
        return jnp.maximum(y, 0.0)

    y = block(x, w1, b1, g1, be1)
    y = block(y, w2, b2, g2, be2)
    return jnp.transpose(y, (0, 3, 1, 2))


if __name__ == "__main__":
    N, Cin, H, W = 2, 4, 16, 16
    Cmid = 8          # mid_channels defaults to out_channels
    Cout = 8

    key = jax.random.PRNGKey(0)
    k = jax.random.split(key, 9)
    w1 = 0.1 * jax.random.normal(k[0], (3, 3, Cin, Cmid), jnp.float32)
    b1 = 0.1 * jax.random.normal(k[1], (Cmid,), jnp.float32)
    g1 = 1.0 + 0.1 * jax.random.normal(k[2], (Cmid,), jnp.float32)
    be1 = 0.1 * jax.random.normal(k[3], (Cmid,), jnp.float32)
    w2 = 0.1 * jax.random.normal(k[4], (3, 3, Cmid, Cout), jnp.float32)
    b2 = 0.1 * jax.random.normal(k[5], (Cout,), jnp.float32)
    g2 = 1.0 + 0.1 * jax.random.normal(k[6], (Cout,), jnp.float32)
    be2 = 0.1 * jax.random.normal(k[7], (Cout,), jnp.float32)
    x = jax.random.normal(k[8], (N, Cin, H, W), jnp.float32)

    ref = _reference(x, w1, b1, g1, be1, w2, b2, g2, be2)

    # exact path (f32 MXU inputs / f32 intermediates)
    out = jax.block_until_ready(
        double_conv(x, w1, b1, g1, be1, w2, b2, g2, be2, compute_dtype=jnp.float32))
    assert out.shape == (N, Cout, H, W)
    err = float(jnp.max(jnp.abs(out - ref)))
    assert jnp.allclose(out, ref, atol=3e-4, rtol=3e-4), err

    # default bf16 MXU-input / bf16-intermediate path (f32 accumulation + f32 BN stats)
    out_bf = jax.block_until_ready(double_conv(x, w1, b1, g1, be1, w2, b2, g2, be2))
    assert out_bf.shape == (N, Cout, H, W)
    assert float(jnp.mean(jnp.abs(out_bf - ref))) < 5e-2
    assert float(jnp.max(jnp.abs(out_bf - ref))) < 3.5e-1

    print("KERNEL_OK")
</pallas_src>

<mosaic_0001>
module attributes {stable_mosaic.version = 11 : i64} {
  func.func @_conv1_stats_kernel(%arg0: i32, %arg1: memref<1x18x18x4xf32, #tpu.memory_space<vmem>>, %arg2: memref<9x4x8xf32, #tpu.memory_space<vmem>>, %arg3: memref<1x8xf32, #tpu.memory_space<vmem>>, %arg4: memref<256x8xf32, #tpu.memory_space<vmem>>, %arg5: memref<1x1x8xf32, #tpu.memory_space<vmem>>, %arg6: memref<1x1x8xf32, #tpu.memory_space<vmem>>) attributes {dimension_semantics = [#tpu.dimension_semantics<parallel>], iteration_bounds = array<i64: 2>, scalar_prefetch = 0 : i64, scratch_operands = 0 : i64, tpu.core_type = #tpu.core_type<tc>, window_params = [{transform_indices = @transform_0, window_bounds = array<i64: 1, 18, 18, 4>}, {pipeline_mode = #tpu.pipeline_mode<synchronous>, transform_indices = @transform_1, window_bounds = array<i64: 9, 4, 8>}, {pipeline_mode = #tpu.pipeline_mode<synchronous>, transform_indices = @transform_2, window_bounds = array<i64: 1, 8>}, {transform_indices = @transform_3, window_bounds = array<i64: 256, 8>}, {transform_indices = @transform_4, window_bounds = array<i64: 1, 1, 8>}, {transform_indices = @transform_5, window_bounds = array<i64: 1, 1, 8>}]} {
    %c0 = arith.constant 0 : index
    %c0_0 = arith.constant 0 : index
    %0 = vector.load %arg3[%c0, %c0_0] : memref<1x8xf32, #tpu.memory_space<vmem>>, vector<1x8xf32>
    %c0_1 = arith.constant 0 : index
    %c0_2 = arith.constant 0 : index
    %c0_3 = arith.constant 0 : index
    %c0_4 = arith.constant 0 : index
    %1 = vector.load %arg1[%c0_1, %c0_2, %c0_3, %c0_4] : memref<1x18x18x4xf32, #tpu.memory_space<vmem>>, vector<1x16x16x4xf32>
    %2 = vector.shape_cast %1 : vector<1x16x16x4xf32> to vector<256x4xf32>
    %c0_5 = arith.constant 0 : index
    %c0_6 = arith.constant 0 : index
    %c0_7 = arith.constant 0 : index
    %3 = vector.load %arg2[%c0_5, %c0_6, %c0_7] : memref<9x4x8xf32, #tpu.memory_space<vmem>>, vector<1x4x8xf32>
    %4 = vector.shape_cast %3 : vector<1x4x8xf32> to vector<4x8xf32>
    %cst = arith.constant dense<0.000000e+00> : vector<256x8xf32>
    %5 = tpu.matmul %2, %4, %cst {dimension_numbers = #tpu.dot_dimension_numbers<[1], [0], [0], [1], [0, 0, 1, 1], [], []>} : vector<256x4xf32>, vector<4x8xf32>, vector<256x8xf32> -> vector<256x8xf32>
    %c0_8 = arith.constant 0 : index
    %c0_9 = arith.constant 0 : index
    %c1 = arith.constant 1 : index
    %c0_10 = arith.constant 0 : index
    %6 = vector.load %arg1[%c0_8, %c0_9, %c1, %c0_10] : memref<1x18x18x4xf32, #tpu.memory_space<vmem>>, vector<1x16x16x4xf32>
    %7 = vector.shape_cast %6 : vector<1x16x16x4xf32> to vector<256x4xf32>
    %c1_11 = arith.constant 1 : index
    %c0_12 = arith.constant 0 : index
    %c0_13 = arith.constant 0 : index
    %8 = vector.load %arg2[%c1_11, %c0_12, %c0_13] : memref<9x4x8xf32, #tpu.memory_space<vmem>>, vector<1x4x8xf32>
    %9 = vector.shape_cast %8 : vector<1x4x8xf32> to vector<4x8xf32>
    %cst_14 = arith.constant dense<0.000000e+00> : vector<256x8xf32>
    %10 = tpu.matmul %7, %9, %cst_14 {dimension_numbers = #tpu.dot_dimension_numbers<[1], [0], [0], [1], [0, 0, 1, 1], [], []>} : vector<256x4xf32>, vector<4x8xf32>, vector<256x8xf32> -> vector<256x8xf32>
    %11 = arith.addf %5, %10 : vector<256x8xf32>
    %c0_15 = arith.constant 0 : index
    %c0_16 = arith.constant 0 : index
    %c2 = arith.constant 2 : index
    %c0_17 = arith.constant 0 : index
    %12 = vector.load %arg1[%c0_15, %c0_16, %c2, %c0_17] : memref<1x18x18x4xf32, #tpu.memory_space<vmem>>, vector<1x16x16x4xf32>
    %13 = vector.shape_cast %12 : vector<1x16x16x4xf32> to vector<256x4xf32>
    %c2_18 = arith.constant 2 : index
    %c0_19 = arith.constant 0 : index
    %c0_20 = arith.constant 0 : index
    %14 = vector.load %arg2[%c2_18, %c0_19, %c0_20] : memref<9x4x8xf32, #tpu.memory_space<vmem>>, vector<1x4x8xf32>
    %15 = vector.shape_cast %14 : vector<1x4x8xf32> to vector<4x8xf32>
    %cst_21 = arith.constant dense<0.000000e+00> : vector<256x8xf32>
    %16 = tpu.matmul %13, %15, %cst_21 {dimension_numbers = #tpu.dot_dimension_numbers<[1], [0], [0], [1], [0, 0, 1, 1], [], []>} : vector<256x4xf32>, vector<4x8xf32>, vector<256x8xf32> -> vector<256x8xf32>
    %17 = arith.addf %11, %16 : vector<256x8xf32>
    %c0_22 = arith.constant 0 : index
    %c1_23 = arith.constant 1 : index
    %c0_24 = arith.constant 0 : index
    %c0_25 = arith.constant 0 : index
    %18 = vector.load %arg1[%c0_22, %c1_23, %c0_24, %c0_25] : memref<1x18x18x4xf32, #tpu.memory_space<vmem>>, vector<1x16x16x4xf32>
    %19 = vector.shape_cast %18 : vector<1x16x16x4xf32> to vector<256x4xf32>
    %c3 = arith.constant 3 : index
    %c0_26 = arith.constant 0 : index
    %c0_27 = arith.constant 0 : index
    %20 = vector.load %arg2[%c3, %c0_26, %c0_27] : memref<9x4x8xf32, #tpu.memory_space<vmem>>, vector<1x4x8xf32>
    %21 = vector.shape_cast %20 : vector<1x4x8xf32> to vector<4x8xf32>
    %cst_28 = arith.constant dense<0.000000e+00> : vector<256x8xf32>
    %22 = tpu.matmul %19, %21, %cst_28 {dimension_numbers = #tpu.dot_dimension_numbers<[1], [0], [0], [1], [0, 0, 1, 1], [], []>} : vector<256x4xf32>, vector<4x8xf32>, vector<256x8xf32> -> vector<256x8xf32>
    %23 = arith.addf %17, %22 : vector<256x8xf32>
    %c0_29 = arith.constant 0 : index
    %c1_30 = arith.constant 1 : index
    %c1_31 = arith.constant 1 : index
    %c0_32 = arith.constant 0 : index
    %24 = vector.load %arg1[%c0_29, %c1_30, %c1_31, %c0_32] : memref<1x18x18x4xf32, #tpu.memory_space<vmem>>, vector<1x16x16x4xf32>
    %25 = vector.shape_cast %24 : vector<1x16x16x4xf32> to vector<256x4xf32>
    %c4 = arith.constant 4 : index
    %c0_33 = arith.constant 0 : index
    %c0_34 = arith.constant 0 : index
    %26 = vector.load %arg2[%c4, %c0_33, %c0_34] : memref<9x4x8xf32, #tpu.memory_space<vmem>>, vector<1x4x8xf32>
    %27 = vector.shape_cast %26 : vector<1x4x8xf32> to vector<4x8xf32>
    %cst_35 = arith.constant dense<0.000000e+00> : vector<256x8xf32>
    %28 = tpu.matmul %25, %27, %cst_35 {dimension_numbers = #tpu.dot_dimension_numbers<[1], [0], [0], [1], [0, 0, 1, 1], [], []>} : vector<256x4xf32>, vector<4x8xf32>, vector<256x8xf32> -> vector<256x8xf32>
    %29 = arith.addf %23, %28 : vector<256x8xf32>
    %c0_36 = arith.constant 0 : index
    %c1_37 = arith.constant 1 : index
    %c2_38 = arith.constant 2 : index
    %c0_39 = arith.constant 0 : index
    %30 = vector.load %arg1[%c0_36, %c1_37, %c2_38, %c0_39] : memref<1x18x18x4xf32, #tpu.memory_space<vmem>>, vector<1x16x16x4xf32>
    %31 = vector.shape_cast %30 : vector<1x16x16x4xf32> to vector<256x4xf32>
    %c5 = arith.constant 5 : index
    %c0_40 = arith.constant 0 : index
    %c0_41 = arith.constant 0 : index
    %32 = vector.load %arg2[%c5, %c0_40, %c0_41] : memref<9x4x8xf32, #tpu.memory_space<vmem>>, vector<1x4x8xf32>
    %33 = vector.shape_cast %32 : vector<1x4x8xf32> to vector<4x8xf32>
    %cst_42 = arith.constant dense<0.000000e+00> : vector<256x8xf32>
    %34 = tpu.matmul %31, %33, %cst_42 {dimension_numbers = #tpu.dot_dimension_numbers<[1], [0], [0], [1], [0, 0, 1, 1], [], []>} : vector<256x4xf32>, vector<4x8xf32>, vector<256x8xf32> -> vector<256x8xf32>
    %35 = arith.addf %29, %34 : vector<256x8xf32>
    %c0_43 = arith.constant 0 : index
    %c2_44 = arith.constant 2 : index
    %c0_45 = arith.constant 0 : index
    %c0_46 = arith.constant 0 : index
    %36 = vector.load %arg1[%c0_43, %c2_44, %c0_45, %c0_46] : memref<1x18x18x4xf32, #tpu.memory_space<vmem>>, vector<1x16x16x4xf32>
    %37 = vector.shape_cast %36 : vector<1x16x16x4xf32> to vector<256x4xf32>
    %c6 = arith.constant 6 : index
    %c0_47 = arith.constant 0 : index
    %c0_48 = arith.constant 0 : index
    %38 = vector.load %arg2[%c6, %c0_47, %c0_48] : memref<9x4x8xf32, #tpu.memory_space<vmem>>, vector<1x4x8xf32>
    %39 = vector.shape_cast %38 : vector<1x4x8xf32> to vector<4x8xf32>
    %cst_49 = arith.constant dense<0.000000e+00> : vector<256x8xf32>
    %40 = tpu.matmul %37, %39, %cst_49 {dimension_numbers = #tpu.dot_dimension_numbers<[1], [0], [0], [1], [0, 0, 1, 1], [], []>} : vector<256x4xf32>, vector<4x8xf32>, vector<256x8xf32> -> vector<256x8xf32>
    %41 = arith.addf %35, %40 : vector<256x8xf32>
    %c0_50 = arith.constant 0 : index
    %c2_51 = arith.constant 2 : index
    %c1_52 = arith.constant 1 : index
    %c0_53 = arith.constant 0 : index
    %42 = vector.load %arg1[%c0_50, %c2_51, %c1_52, %c0_53] : memref<1x18x18x4xf32, #tpu.memory_space<vmem>>, vector<1x16x16x4xf32>
    %43 = vector.shape_cast %42 : vector<1x16x16x4xf32> to vector<256x4xf32>
    %c7 = arith.constant 7 : index
    %c0_54 = arith.constant 0 : index
    %c0_55 = arith.constant 0 : index
    %44 = vector.load %arg2[%c7, %c0_54, %c0_55] : memref<9x4x8xf32, #tpu.memory_space<vmem>>, vector<1x4x8xf32>
    %45 = vector.shape_cast %44 : vector<1x4x8xf32> to vector<4x8xf32>
    %cst_56 = arith.constant dense<0.000000e+00> : vector<256x8xf32>
    %46 = tpu.matmul %43, %45, %cst_56 {dimension_numbers = #tpu.dot_dimension_numbers<[1], [0], [0], [1], [0, 0, 1, 1], [], []>} : vector<256x4xf32>, vector<4x8xf32>, vector<256x8xf32> -> vector<256x8xf32>
    %47 = arith.addf %41, %46 : vector<256x8xf32>
    %c0_57 = arith.constant 0 : index
    %c2_58 = arith.constant 2 : index
    %c2_59 = arith.constant 2 : index
    %c0_60 = arith.constant 0 : index
    %48 = vector.load %arg1[%c0_57, %c2_58, %c2_59, %c0_60] : memref<1x18x18x4xf32, #tpu.memory_space<vmem>>, vector<1x16x16x4xf32>
    %49 = vector.shape_cast %48 : vector<1x16x16x4xf32> to vector<256x4xf32>
    %c8 = arith.constant 8 : index
    %c0_61 = arith.constant 0 : index
    %c0_62 = arith.constant 0 : index
    %50 = vector.load %arg2[%c8, %c0_61, %c0_62] : memref<9x4x8xf32, #tpu.memory_space<vmem>>, vector<1x4x8xf32>
    %51 = vector.shape_cast %50 : vector<1x4x8xf32> to vector<4x8xf32>
    %cst_63 = arith.constant dense<0.000000e+00> : vector<256x8xf32>
    %52 = tpu.matmul %49, %51, %cst_63 {dimension_numbers = #tpu.dot_dimension_numbers<[1], [0], [0], [1], [0, 0, 1, 1], [], []>} : vector<256x4xf32>, vector<4x8xf32>, vector<256x8xf32> -> vector<256x8xf32>
    %53 = arith.addf %47, %52 : vector<256x8xf32>
    %54 = vector.broadcast %0 : vector<1x8xf32> to vector<256x8xf32>
    %55 = arith.addf %53, %54 : vector<256x8xf32>
    %c0_64 = arith.constant 0 : index
    %c0_65 = arith.constant 0 : index
    %56 = vector.load %arg4[%c0_64, %c0_65] : memref<256x8xf32, #tpu.memory_space<vmem>>, vector<256x8xf32>
    tpu.vector_store %arg4[%c0_64, %c0_65], %55 {strides = array<i32>} : memref<256x8xf32, #tpu.memory_space<vmem>>, vector<256x8xf32>,
    %cst_66 = arith.constant dense<0.000000e+00> : vector<8xf32>
    %57 = vector.multi_reduction <add>, %55, %cst_66 [0] : vector<256x8xf32> to vector<8xf32>
    %58 = vector.shape_cast %57 : vector<8xf32> to vector<1x8xf32>
    %cst_67 = arith.constant 3.906250e-03 : f32
    %59 = vector.broadcast %cst_67 : f32 to vector<1x8xf32>
    %60 = arith.mulf %58, %59 : vector<1x8xf32>
    %61 = vector.broadcast %60 : vector<1x8xf32> to vector<256x8xf32>
    %62 = arith.subf %55, %61 : vector<256x8xf32>
    %63 = arith.mulf %62, %62 : vector<256x8xf32>
    %cst_68 = arith.constant dense<0.000000e+00> : vector<8xf32>
    %64 = vector.multi_reduction <add>, %63, %cst_68 [0] : vector<256x8xf32> to vector<8xf32>
    %65 = vector.shape_cast %64 : vector<8xf32> to vector<1x8xf32>
    %66 = vector.shape_cast %58 : vector<1x8xf32> to vector<1x1x8xf32>
    %c0_69 = arith.constant 0 : index
    %c0_70 = arith.constant 0 : index
    %c0_71 = arith.constant 0 : index
    %67 = vector.load %arg5[%c0_69, %c0_70, %c0_71] : memref<1x1x8xf32, #tpu.memory_space<vmem>>, vector<1x1x8xf32>
    tpu.vector_store %arg5[%c0_69, %c0_70, %c0_71], %66 {strides = array<i32>} : memref<1x1x8xf32, #tpu.memory_space<vmem>>, vector<1x1x8xf32>,
    %68 = vector.shape_cast %65 : vector<1x8xf32> to vector<1x1x8xf32>
    %c0_72 = arith.constant 0 : index
    %c0_73 = arith.constant 0 : index
    %c0_74 = arith.constant 0 : index
    %69 = vector.load %arg6[%c0_72, %c0_73, %c0_74] : memref<1x1x8xf32, #tpu.memory_space<vmem>>, vector<1x1x8xf32>
    tpu.vector_store %arg6[%c0_72, %c0_73, %c0_74], %68 {strides = array<i32>} : memref<1x1x8xf32, #tpu.memory_space<vmem>>, vector<1x1x8xf32>,
    return
  }
  func.func @transform_0(%arg0: i32) -> (i32, i32, i32, i32) {
    %c0_i32 = arith.constant 0 : i32
    %c0_i32_0 = arith.constant 0 : i32
    %c0_i32_1 = arith.constant 0 : i32
    %c0_i32_2 = arith.constant 0 : i32
    return %arg0, %c0_i32, %c0_i32_0, %c0_i32_1 : i32, i32, i32, i32
  }
  func.func @transform_1(%arg0: i32) -> (i32, i32, i32) {
    %c0_i32 = arith.constant 0 : i32
    %c0_i32_0 = arith.constant 0 : i32
    %c0_i32_1 = arith.constant 0 : i32
    %c0_i32_2 = arith.constant 0 : i32
    return %c0_i32, %c0_i32_0, %c0_i32_1 : i32, i32, i32
  }
  func.func @transform_2(%arg0: i32) -> (i32, i32) {
    %c0_i32 = arith.constant 0 : i32
    %c0_i32_0 = arith.constant 0 : i32
    %c0_i32_1 = arith.constant 0 : i32
    return %c0_i32, %c0_i32_0 : i32, i32
  }
  func.func @transform_3(%arg0: i32) -> (i32, i32) {
    %c0_i32 = arith.constant 0 : i32
    %c0_i32_0 = arith.constant 0 : i32
    return %arg0, %c0_i32 : i32, i32
  }
  func.func @transform_4(%arg0: i32) -> (i32, i32, i32) {
    %c0_i32 = arith.constant 0 : i32
    %c0_i32_0 = arith.constant 0 : i32
    %c0_i32_1 = arith.constant 0 : i32
    return %arg0, %c0_i32, %c0_i32_0 : i32, i32, i32
  }
  func.func @transform_5(%arg0: i32) -> (i32, i32, i32) {
    %c0_i32 = arith.constant 0 : i32
    %c0_i32_0 = arith.constant 0 : i32
    %c0_i32_1 = arith.constant 0 : i32
    return %arg0, %c0_i32, %c0_i32_0 : i32, i32, i32
  }
}

</mosaic_0001>

<llo_original>
// kernel: tpu_custom_call.1
$region0: #{tpu_custom_call.1}
  #allocation0 [shape = 'u32[]', space=smem, size = 0x4, offset = 0x4, fixed_abs, tag = 'smem constant byte address 0x4 - core index']
  #allocation1 [shape = 'u32[72,128]{1,0:T(1,128)}', space=vmem, size = 0x9000, scoped, tag = 'internal scratch']
  %s0 = inlined_call_operand.vmem [shape: f32[2,18,18,4], index: 0, kind: input, shape index: {}]
  %s1 = inlined_call_operand.vmem [shape: f32[9,4,8], index: 1, kind: input, shape index: {}]
  %s2 = inlined_call_operand.vmem [shape: f32[1,8], index: 2, kind: input, shape index: {}]
  %s3 = inlined_call_operand.vmem [shape: f32[512,8], index: 3, kind: output, shape index: {0}]
  %s4 = inlined_call_operand.hbm [shape: f32[2,1,8], index: 4, kind: output, shape index: {1}]
  %s5 = inlined_call_operand.hbm [shape: f32[2,1,8], index: 5, kind: output, shape index: {2}]
  %6 = xla_tuple %s3, %s4, %s5
  %s7 = sld [smem:[#allocation0]]
  $region61: #{tpu_custom_call.1} parent=0
    _
  %s9 = ssub.s32 1, %s7
  %s10 = scalar_select 0, %s9, %s7
  $region1: #{tpu_custom_call.1} parent=0
    #allocation2 [shape = 'u8[1024]{0}', space=vmem, size = 0x400, scoped, tag = 'output window, operand 1']
    #allocation3 [shape = 's32[2]{0}', space=sflag, size = 0x8, scoped, tag = 'scoped memory for tpu_custom_call.1']
    #allocation4 [shape = 'u8[1024]{0}', space=vmem, size = 0x400, scoped, tag = 'output window, operand 2']
    #allocation5 [shape = 's32[2]{0}', space=sflag, size = 0x8, scoped, tag = 'scoped memory for tpu_custom_call.1']
    %11 = vsyncpa [#allocation3], 0
    %s12 = scalar_lea.sflag [#allocation3], 1
    %13 = vsyncpa %s12, 0
    %14 = vsyncpa [#allocation5], 0
    %s15 = scalar_lea.sflag [#allocation5], 1
    %16 = vsyncpa %s15, 0
    loop: start=0, step=1, limit=4
    $region2: #{tpu_custom_call.1} parent=1 // loop_pre_header
      _
    $region3: #{tpu_custom_call.1} parent=1 // loop_header
      %s18 = sphi 0, %s22
      %p19 = scmp.ge.s32.totalorder %s18, 4
      %s28 = sphi 0, %s30
      %s31 = sphi 0, %s28
      %s32 = sphi 0, %s31
      %s48 = sphi 0, %s32
      %s52 = sphi 0, %s52
      %s54 = sphi 0, %s52
      %s55 = sphi 0, %s54
      %s69 = sphi 0, %s55
      %s73 = sphi 0, %s73
      %s75 = sphi 0, %s73
      %s76 = sphi 0, %s75
      %s90 = sphi 0, %s76
      %s96 = sphi 0, %s98
      %s99 = sphi 0, %s96
      %s100 = sphi 0, %s99
      %s116 = sphi 0, %s100
      %s122 = sphi 0, %s124
      %s125 = sphi 0, %s122
      %s126 = sphi 0, %s125
      %s142 = sphi 0, %s126
      %s148 = sphi 0, %s150
      %s151 = sphi 0, %s148
      %s152 = sphi 0, %s151
      %s168 = sphi 0, %s152
    $region4: #{tpu_custom_call.1} parent=1 // loop_header_branch
      %21 = sbr.rel (%p19) target = $region8
    $region5: #{tpu_custom_call.1} parent=1 // loop_body
      %s23 = ssub.s32 %s18, 1
      %s24 = ssub.s32 %s18, 2
      %s25 = sadd.s32 %s18, 1
      %s26 = ssub.s32 %s18, %s25
      %p27 = scmp.eq.s32.totalorder %s26, 0
      %s29 = sadd.s32 %s28, 1
      %s30 = scalar_select %p27, %s28, %s29
      %p33 = pneg %p27
      %p34 = scmp.eq.s32.totalorder %s18, 1
      %p35 = por %p33, %p34
      %p36 = scmp.ne.s32.totalorder %s28, %s31
      %p37 = scmp.eq.s32.totalorder %s18, 0
      %p38 = por %p36, %p37
      %p39 = scmp.ne.s32.totalorder %s28, %s31
      %p40 = scmp.eq.s32.totalorder %s23, 1
      %p41 = por %p39, %p40
      %p42 = scmp.ne.s32.totalorder %s31, %s32
      %p43 = scmp.eq.s32.totalorder %s23, 0
      %p44 = por %p42, %p43
      %p45 = scmp.ne.s32.totalorder %s31, %s32
      %p46 = scmp.eq.s32.totalorder %s24, 1
      %p47 = por %p45, %p46
      %p49 = scmp.ne.s32.totalorder %s32, %s48
      %p50 = scmp.eq.s32.totalorder %s24, 0
      %p51 = por %p49, %p50
      %s53 = sadd.s32 %s52, 1
      %p56 = scmp.eq.s32.totalorder %s18, 1
      %p57 = scmp.ne.s32.totalorder %s52, %s54
      %p58 = scmp.eq.s32.totalorder %s18, 0
      %p59 = por %p57, %p58
      %p60 = scmp.ne.s32.totalorder %s52, %s54
      %p61 = scmp.eq.s32.totalorder %s23, 1
      %p62 = por %p60, %p61
      %p63 = scmp.ne.s32.totalorder %s54, %s55
      %p64 = scmp.eq.s32.totalorder %s23, 0
      %p65 = por %p63, %p64
      %p66 = scmp.ne.s32.totalorder %s54, %s55
      %p67 = scmp.eq.s32.totalorder %s24, 1
      %p68 = por %p66, %p67
      %p70 = scmp.ne.s32.totalorder %s55, %s69
      %p71 = scmp.eq.s32.totalorder %s24, 0
      %p72 = por %p70, %p71
      %s74 = sadd.s32 %s73, 1
      %p77 = scmp.eq.s32.totalorder %s18, 1
      %p78 = scmp.ne.s32.totalorder %s73, %s75
      %p79 = scmp.eq.s32.totalorder %s18, 0
      %p80 = por %p78, %p79
      %p81 = scmp.ne.s32.totalorder %s73, %s75
      %p82 = scmp.eq.s32.totalorder %s23, 1
      %p83 = por %p81, %p82
      %p84 = scmp.ne.s32.totalorder %s75, %s76
      %p85 = scmp.eq.s32.totalorder %s23, 0
      %p86 = por %p84, %p85
      %p87 = scmp.ne.s32.totalorder %s75, %s76
      %p88 = scmp.eq.s32.totalorder %s24, 1
      %p89 = por %p87, %p88
      %p91 = scmp.ne.s32.totalorder %s76, %s90
      %p92 = scmp.eq.s32.totalorder %s24, 0
      %p93 = por %p91, %p92
      %s94 = ssub.s32 %s18, %s25
      %p95 = scmp.eq.s32.totalorder %s94, 0
      %s97 = sadd.s32 %s96, 1
      %s98 = scalar_select %p95, %s96, %s97
      %p101 = pneg %p95
      %p102 = scmp.eq.s32.totalorder %s18, 1
      %p103 = por %p101, %p102
      %p104 = scmp.ne.s32.totalorder %s96, %s99
      %p105 = scmp.eq.s32.totalorder %s18, 0
      %p106 = por %p104, %p105
      %p107 = scmp.ne.s32.totalorder %s96, %s99
      %p108 = scmp.eq.s32.totalorder %s23, 1
      %p109 = por %p107, %p108
      %p110 = scmp.ne.s32.totalorder %s99, %s100
      %p111 = scmp.eq.s32.totalorder %s23, 0
      %p112 = por %p110, %p111
      %p113 = scmp.ne.s32.totalorder %s99, %s100
      %p114 = scmp.eq.s32.totalorder %s24, 1
      %p115 = por %p113, %p114
      %p117 = scmp.ne.s32.totalorder %s100, %s116
      %p118 = scmp.eq.s32.totalorder %s24, 0
      %p119 = por %p117, %p118
      %s120 = ssub.s32 %s18, %s25
      %p121 = scmp.eq.s32.totalorder %s120, 0
      %s123 = sadd.s32 %s122, 1
      %s124 = scalar_select %p121, %s122, %s123
      %p127 = pneg %p121
      %p128 = scmp.eq.s32.totalorder %s18, 1
      %p129 = por %p127, %p128
      %p130 = scmp.ne.s32.totalorder %s122, %s125
      %p131 = scmp.eq.s32.totalorder %s18, 0
      %p132 = por %p130, %p131
      %p133 = scmp.ne.s32.totalorder %s122, %s125
      %p134 = scmp.eq.s32.totalorder %s23, 1
      %p135 = por %p133, %p134
      %p136 = scmp.ne.s32.totalorder %s125, %s126
      %p137 = scmp.eq.s32.totalorder %s23, 0
      %p138 = por %p136, %p137
      %p139 = scmp.ne.s32.totalorder %s125, %s126
      %p140 = scmp.eq.s32.totalorder %s24, 1
      %p141 = por %p139, %p140
      %p143 = scmp.ne.s32.totalorder %s126, %s142
      %p144 = scmp.eq.s32.totalorder %s24, 0
      %p145 = por %p143, %p144
      %s146 = ssub.s32 %s18, %s25
      %p147 = scmp.eq.s32.totalorder %s146, 0
      %s149 = sadd.s32 %s148, 1
      %s150 = scalar_select %p147, %s148, %s149
      %p153 = pneg %p147
      %p154 = scmp.eq.s32.totalorder %s18, 1
      %p155 = por %p153, %p154
      %p156 = scmp.ne.s32.totalorder %s148, %s151
      %p157 = scmp.eq.s32.totalorder %s18, 0
      %p158 = por %p156, %p157
      %p159 = scmp.ne.s32.totalorder %s148, %s151
      %p160 = scmp.eq.s32.totalorder %s23, 1
      %p161 = por %p159, %p160
      %p162 = scmp.ne.s32.totalorder %s151, %s152
      %p163 = scmp.eq.s32.totalorder %s23, 0
      %p164 = por %p162, %p163
      %p165 = scmp.ne.s32.totalorder %s151, %s152
      %p166 = scmp.eq.s32.totalorder %s24, 1
      %p167 = por %p165, %p166
      %p169 = scmp.ne.s32.totalorder %s152, %s168
      %p170 = scmp.eq.s32.totalorder %s24, 0
      %p171 = por %p169, %p170
      %p172 = scmp.le.s32.totalorder 1, %s18
      %p173 = scmp.lt.s32.totalorder %s18, 3
      %p174 = pnand %p172, %p173
      %p175 = pneg %p174
      // Predicated region
      $region9: #{tpu_custom_call.1} parent=5 // pred_check
        _
      $region10: #{tpu_custom_call.1} parent=5 // pred_check_branch
        %177 = sbr.rel (%p174) target = $region12
      $region11: #{tpu_custom_call.1} parent=5 // pred_region
        %s178 = ssub.s32 %s18, 1
        // Predicated region
        $region13: #{tpu_custom_call.1} parent=11 // pred_check
          %p179 = pneg %p65
        $region14: #{tpu_custom_call.1} parent=11 // pred_check_branch
          %181 = sbr.rel (%p179) target = $region16
        $region15: #{tpu_custom_call.1} parent=11 // pred_region
          _
        $region16: #{tpu_custom_call.1} parent=11 // pred_fallthru
          _
        // Predicated region
        $region17: #{tpu_custom_call.1} parent=11 // pred_check
          %p182 = pneg %p86
        $region18: #{tpu_custom_call.1} parent=11 // pred_check_branch
          %184 = sbr.rel (%p182) target = $region20
        $region19: #{tpu_custom_call.1} parent=11 // pred_region
          _
        $region20: #{tpu_custom_call.1} parent=11 // pred_fallthru
          _
      $region12: #{tpu_custom_call.1} parent=5 // pred_fallthru
        _
      %p185 = scmp.lt.s32.totalorder %s18, 2
      // Predicated region
      $region21: #{tpu_custom_call.1} parent=5 // pred_check
        %p186 = pneg %p185
      $region22: #{tpu_custom_call.1} parent=5 // pred_check_branch
        %188 = sbr.rel (%p186) target = $region24
      $region23: #{tpu_custom_call.1} parent=5 // pred_region
        // Predicated region
        $region25: #{tpu_custom_call.1} parent=23 // pred_check
          %p189 = pneg %p38
        $region26: #{tpu_custom_call.1} parent=23 // pred_check_branch
          %191 = sbr.rel (%p189) target = $region28
        $region27: #{tpu_custom_call.1} parent=23 // pred_region
          %p192 = scmp.lt.s32.totalorder %s18, 1
          %s193 = scalar_select %p192, %s18, 1
          %s194 = smul.addr %s193, 54
          %s195 = smul.addr %s194, 8
          %s196 = scalar_lea.vmem %s0, %s195
        $region28: #{tpu_custom_call.1} parent=23 // pred_fallthru
          _
      $region24: #{tpu_custom_call.1} parent=5 // pred_fallthru
        _
      %p197 = scmp.le.s32.totalorder 1, %s18
      %p198 = scmp.lt.s32.totalorder %s18, 3
      %p199 = pnand %p197, %p198
      %p200 = pneg %p199
      // Predicated region
      $region29: #{tpu_custom_call.1} parent=5 // pred_check
        _
      $region30: #{tpu_custom_call.1} parent=5 // pred_check_branch
        %202 = sbr.rel (%p199) target = $region32
      $region31: #{tpu_custom_call.1} parent=5 // pred_region
        %s203 = ssub.s32 %s18, 1
        %p204 = scmp.lt.s32.totalorder %s23, 1
        %s205 = scalar_select %p204, %s23, 1
        %s206 = smul.addr %s205, 54
        %s207 = smul.addr %s206, 8
        %s208 = scalar_lea.vmem %s0, %s207
        %p209 = pneg %p44
        %p210 = pneg %p41
        %p211 = pneg %p65
        %p212 = pneg %p62
        %p213 = pneg %p86
        %p214 = pneg %p83
        %p215 = pneg %p112
        %p216 = pneg %p109
        %s217 = smul.u32 32, %s23
        %p218 = scmp.lt.s32.totalorder %s217, 63
        %s219 = scalar_select %p218, %s217, 63
        %s220 = smul.addr %s219, 8
        %s221 = scalar_lea.vmem %s3, %s220
        %p222 = pneg %p138
        %p223 = pneg %p135
        %s224 = sand.u32 %s125, 1
        %s225 = scalar_lea.sflag [#allocation3], %s224
        %s226 = sand.u32 %s125, 1
        %s227 = scalar_lea.vmem [#allocation2], %s226
        %p228 = pneg %p164
        %p229 = pneg %p161
        %s230 = sand.u32 %s151, 1
        %s231 = scalar_lea.sflag [#allocation5], %s230
        %s232 = sand.u32 %s151, 1
        %s233 = scalar_lea.vmem [#allocation4], %s232
        %p234 = scmp.lt.s32.totalorder %s23, 1
        %s235 = scalar_select %p234, %s23, 1
        %s236 = smul.addr %s235, 54
        %s237 = smul.addr %s236, 8
        %s238 = scalar_lea.vmem %s0, %s237
        %s239 = smul.u32 32, %s23
        %p240 = scmp.lt.s32.totalorder %s239, 63
        %s241 = scalar_select %p240, %s239, 63
        %s242 = smul.addr %s241, 8
        %s243 = scalar_lea.vmem %s3, %s242
        %s244 = smul.u32 32, %s23
        %v245 = vld [vmem:[%s2] sm:$0x1]
        %v246 = vld [vmem:[%s238] sm:$0xff]
        %v247 = vld [vmem:[%s238 + $0x8] sm:$0xff]
        %v248 = vld [vmem:[%s238 + $0x18] sm:$0xff]
        %v249 = vld [vmem:[%s238 + $0x20] sm:$0xff]
        %v250 = vld [vmem:[%s238 + $0x30] sm:$0xff]
        %v251 = vld [vmem:[%s238 + $0x38] sm:$0xff]
        %v252 = vld [vmem:[%s238 + $0x48] sm:$0xff]
        %v253 = vld [vmem:[%s238 + $0x50] sm:$0xff]
        %v254 = vld [vmem:[%s238 + $0x60] sm:$0xff]
        %v255 = vld [vmem:[%s238 + $0x68] sm:$0xff]
        %v256 = vld [vmem:[%s238 + $0x78] sm:$0xff]
        %v257 = vld [vmem:[%s238 + $0x80] sm:$0xff]
        %v258 = vld [vmem:[%s238 + $0x90] sm:$0xff]
        %v259 = vld [vmem:[%s238 + $0x98] sm:$0xff]
        %v260 = vld [vmem:[%s238 + $0xa8] sm:$0xff]
        %v261 = vld [vmem:[%s238 + $0xb0] sm:$0xff]
        %v262 = vld [vmem:[%s238 + $0xc0] sm:$0xff]
        %v263 = vld [vmem:[%s238 + $0xc8] sm:$0xff]
        %v264 = vld [vmem:[%s238 + $0xd8] sm:$0xff]
        %v265 = vld [vmem:[%s238 + $0xe0] sm:$0xff]
        %v266 = vld [vmem:[%s238 + $0xf0] sm:$0xff]
        %v267 = vld [vmem:[%s238 + $0xf8] sm:$0xff]
        %v268 = vld [vmem:[%s238 + $0x108] sm:$0xff]
        %v269 = vld [vmem:[%s238 + $0x110] sm:$0xff]
        %v270 = vld [vmem:[%s238 + $0x120] sm:$0xff]
        %v271 = vld [vmem:[%s238 + $0x128] sm:$0xff]
        %v272 = vld [vmem:[%s238 + $0x138] sm:$0xff]
        %v273 = vld [vmem:[%s238 + $0x140] sm:$0xff]
        %v274 = vld [vmem:[%s238 + $0x150] sm:$0xff]
        %v275 = vld [vmem:[%s238 + $0x158] sm:$0xff]
        %v276 = vld [vmem:[%s238 + $0x168] sm:$0xff]
        %v277 = vld [vmem:[%s238 + $0x170] sm:$0xff]
        %v278 = vld [vmem:[%s1] sm:$0xf]
        %v279 = vld [vmem:[%s238 + $0x1] sm:$0xff]
        %v280 = vld [vmem:[%s238 + $0x9] sm:$0xff]
        %v281 = vld [vmem:[%s238 + $0x19] sm:$0xff]
        %v282 = vld [vmem:[%s238 + $0x21] sm:$0xff]
        %v283 = vld [vmem:[%s238 + $0x31] sm:$0xff]
        %v284 = vld [vmem:[%s238 + $0x39] sm:$0xff]
        %v285 = vld [vmem:[%s238 + $0x49] sm:$0xff]
        %v286 = vld [vmem:[%s238 + $0x51] sm:$0xff]
        %v287 = vld [vmem:[%s238 + $0x61] sm:$0xff]
        %v288 = vld [vmem:[%s238 + $0x69] sm:$0xff]
        %v289 = vld [vmem:[%s238 + $0x79] sm:$0xff]
        %v290 = vld [vmem:[%s238 + $0x81] sm:$0xff]
        %v291 = vld [vmem:[%s238 + $0x91] sm:$0xff]
        %v292 = vld [vmem:[%s238 + $0x99] sm:$0xff]
        %v293 = vld [vmem:[%s238 + $0xa9] sm:$0xff]
        %v294 = vld [vmem:[%s238 + $0xb1] sm:$0xff]
        %v295 = vld [vmem:[%s238 + $0xc1] sm:$0xff]
        %v296 = vld [vmem:[%s238 + $0xc9] sm:$0xff]
        %v297 = vld [vmem:[%s238 + $0xd9] sm:$0xff]
        %v298 = vld [vmem:[%s238 + $0xe1] sm:$0xff]
        %v299 = vld [vmem:[%s238 + $0xf1] sm:$0xff]
        %v300 = vld [vmem:[%s238 + $0xf9] sm:$0xff]
        %v301 = vld [vmem:[%s238 + $0x109] sm:$0xff]
        %v302 = vld [vmem:[%s238 + $0x111] sm:$0xff]
        %v303 = vld [vmem:[%s238 + $0x121] sm:$0xff]
        %v304 = vld [vmem:[%s238 + $0x129] sm:$0xff]
        %v305 = vld [vmem:[%s238 + $0x139] sm:$0xff]
        %v306 = vld [vmem:[%s238 + $0x141] sm:$0xff]
        %v307 = vld [vmem:[%s238 + $0x151] sm:$0xff]
        %v308 = vld [vmem:[%s238 + $0x159] sm:$0xff]
        %v309 = vld [vmem:[%s238 + $0x169] sm:$0xff]
        %v310 = vld [vmem:[%s238 + $0x171] sm:$0xff]
        %s311 = scalar_lea.vmem %s1, 4
        %v312 = vld [vmem:[%s311] sm:$0xf]
        %vm313 = vcmask 31744
        %v315 = vsel %vm313, %v279, 0
        %v318 = vsel %vm313, %v280, 0
        %v321 = vsel %vm313, %v281, 0
        %v324 = vsel %vm313, %v282, 0
        %v327 = vsel %vm313, %v283, 0
        %v330 = vsel %vm313, %v284, 0
        %v333 = vsel %vm313, %v285, 0
        %v336 = vsel %vm313, %v286, 0
        %v339 = vsel %vm313, %v287, 0
        %v342 = vsel %vm313, %v288, 0
        %v345 = vsel %vm313, %v289, 0
        %v348 = vsel %vm313, %v290, 0
        %v351 = vsel %vm313, %v291, 0
        %v354 = vsel %vm313, %v292, 0
        %v357 = vsel %vm313, %v293, 0
        %v360 = vsel %vm313, %v294, 0
        %v363 = vsel %vm313, %v295, 0
        %v366 = vsel %vm313, %v296, 0
        %v369 = vsel %vm313, %v297, 0
        %v372 = vsel %vm313, %v298, 0
        %v375 = vsel %vm313, %v299, 0
        %v378 = vsel %vm313, %v300, 0
        %v381 = vsel %vm313, %v301, 0
        %v384 = vsel %vm313, %v302, 0
        %v387 = vsel %vm313, %v303, 0
        %v390 = vsel %vm313, %v304, 0
        %v393 = vsel %vm313, %v305, 0
        %v396 = vsel %vm313, %v306, 0
        %v399 = vsel %vm313, %v307, 0
        %v402 = vsel %vm313, %v308, 0
        %v405 = vsel %vm313, %v309, 0
        %v408 = vsel %vm313, %v310, 0
        %vm410 = vcmask 1043456
        %v412 = vsel %vm410, %v312, 0
        %414 = vmatpush.msra.mxu0 0.0
        %415 = vmatpush.msra.mxu0 0.0
        %416 = vmatpush.msra.mxu0 0.0
        %417 = vmatpush.msra.mxu0 0.0
        %418 = vmatpush.msra.mxu0 0.0
        %419 = vmatpush.msra.mxu0 0.0
        %420 = vmatpush.msra.mxu0 0.0
        %421 = vmatpush.msra.mxu0 0.0
        %422 = vmatpush.msra.mxu0 0.0
        %423 = vmatpush.msra.mxu0 0.0
        %424 = vmatpush.msra.mxu0 0.0
        %425 = vmatpush.msra.mxu0 0.0
        %426 = vmatpush.msra.mxu0 0.0
        %427 = vmatpush.msra.mxu0 0.0
        %428 = vmatpush.msra.mxu0 0.0
        %429 = vmatpush.msra.mxu0 %v412
        %430 = vmatmul.f32.gmra.mxu0 %v315
        %v431 = vpop.f32.mrf.mxu0
        %v432 = vadd.f32 0.0, %v431
        %433 = vmatmul.f32.gmra.mxu0 %v318
        %v434 = vpop.f32.mrf.mxu0
        %v435 = vadd.f32 0.0, %v434
        %436 = vmatmul.f32.gmra.mxu0 %v321
        %v437 = vpop.f32.mrf.mxu0
        %v438 = vadd.f32 0.0, %v437
        %439 = vmatmul.f32.gmra.mxu0 %v324
        %v440 = vpop.f32.mrf.mxu0
        %v441 = vadd.f32 0.0, %v440
        %442 = vmatmul.f32.gmra.mxu0 %v327
        %v443 = vpop.f32.mrf.mxu0
        %v444 = vadd.f32 0.0, %v443
        %445 = vmatmul.f32.gmra.mxu0 %v330
        %v446 = vpop.f32.mrf.mxu0
        %v447 = vadd.f32 0.0, %v446
        %448 = vmatmul.f32.gmra.mxu0 %v333
        %v449 = vpop.f32.mrf.mxu0
        %v450 = vadd.f32 0.0, %v449
        %451 = vmatmul.f32.gmra.mxu0 %v336
        %v452 = vpop.f32.mrf.mxu0
        %v453 = vadd.f32 0.0, %v452
        %454 = vmatmul.f32.gmra.mxu0 %v339
        %v455 = vpop.f32.mrf.mxu0
        %v456 = vadd.f32 0.0, %v455
        %457 = vmatmul.f32.gmra.mxu0 %v342
        %v458 = vpop.f32.mrf.mxu0
        %v459 = vadd.f32 0.0, %v458
        %460 = vmatmul.f32.gmra.mxu0 %v345
        %v461 = vpop.f32.mrf.mxu0
        %v462 = vadd.f32 0.0, %v461
        %463 = vmatmul.f32.gmra.mxu0 %v348
        %v464 = vpop.f32.mrf.mxu0
        %v465 = vadd.f32 0.0, %v464
        %466 = vmatmul.f32.gmra.mxu0 %v351
        %v467 = vpop.f32.mrf.mxu0
        %v468 = vadd.f32 0.0, %v467
        %469 = vmatmul.f32.gmra.mxu0 %v354
        %v470 = vpop.f32.mrf.mxu0
        %v471 = vadd.f32 0.0, %v470
        %472 = vmatmul.f32.gmra.mxu0 %v357
        %v473 = vpop.f32.mrf.mxu0
        %v474 = vadd.f32 0.0, %v473
        %475 = vmatmul.f32.gmra.mxu0 %v360
        %v476 = vpop.f32.mrf.mxu0
        %v477 = vadd.f32 0.0, %v476
        %478 = vmatmul.f32.gmra.mxu0 %v363
        %v479 = vpop.f32.mrf.mxu0
        %v480 = vadd.f32 0.0, %v479
        %481 = vmatmul.f32.gmra.mxu0 %v366
        %v482 = vpop.f32.mrf.mxu0
        %v483 = vadd.f32 0.0, %v482
        %484 = vmatmul.f32.gmra.mxu0 %v369
        %v485 = vpop.f32.mrf.mxu0
        %v486 = vadd.f32 0.0, %v485
        %487 = vmatmul.f32.gmra.mxu0 %v372
        %v488 = vpop.f32.mrf.mxu0
        %v489 = vadd.f32 0.0, %v488
        %490 = vmatmul.f32.gmra.mxu0 %v375
        %v491 = vpop.f32.mrf.mxu0
        %v492 = vadd.f32 0.0, %v491
        %493 = vmatmul.f32.gmra.mxu0 %v378
        %v494 = vpop.f32.mrf.mxu0
        %v495 = vadd.f32 0.0, %v494
        %496 = vmatmul.f32.gmra.mxu0 %v381
        %v497 = vpop.f32.mrf.mxu0
        %v498 = vadd.f32 0.0, %v497
        %499 = vmatmul.f32.gmra.mxu0 %v384
        %v500 = vpop.f32.mrf.mxu0
        %v501 = vadd.f32 0.0, %v500
        %502 = vmatmul.f32.gmra.mxu0 %v387
        %v503 = vpop.f32.mrf.mxu0
        %v504 = vadd.f32 0.0, %v503
        %505 = vmatmul.f32.gmra.mxu0 %v390
        %v506 = vpop.f32.mrf.mxu0
        %v507 = vadd.f32 0.0, %v506
        %508 = vmatmul.f32.gmra.mxu0 %v393
        %v509 = vpop.f32.mrf.mxu0
        %v510 = vadd.f32 0.0, %v509
        %511 = vmatmul.f32.gmra.mxu0 %v396
        %v512 = vpop.f32.mrf.mxu0
        %v513 = vadd.f32 0.0, %v512
        %514 = vmatmul.f32.gmra.mxu0 %v399
        %v515 = vpop.f32.mrf.mxu0
        %v516 = vadd.f32 0.0, %v515
        %517 = vmatmul.f32.gmra.mxu0 %v402
        %v518 = vpop.f32.mrf.mxu0
        %v519 = vadd.f32 0.0, %v518
        %520 = vmatmul.f32.gmra.mxu0 %v405
        %v521 = vpop.f32.mrf.mxu0
        %v522 = vadd.f32 0.0, %v521
        %523 = vmatmul.f32.gmra.mxu0 %v408
        %v524 = vpop.f32.mrf.mxu0
        %v525 = vadd.f32 0.0, %v524
        %526 = vdwg.mxu0
        %v528 = vsel %vm313, %v246, 0
        %v531 = vsel %vm313, %v247, 0
        %v534 = vsel %vm313, %v248, 0
        %v537 = vsel %vm313, %v249, 0
        %v540 = vsel %vm313, %v250, 0
        %v543 = vsel %vm313, %v251, 0
        %v546 = vsel %vm313, %v252, 0
        %v549 = vsel %vm313, %v253, 0
        %v552 = vsel %vm313, %v254, 0
        %v555 = vsel %vm313, %v255, 0
        %v558 = vsel %vm313, %v256, 0
        %v561 = vsel %vm313, %v257, 0
        %v564 = vsel %vm313, %v258, 0
        %v567 = vsel %vm313, %v259, 0
        %v570 = vsel %vm313, %v260, 0
        %v573 = vsel %vm313, %v261, 0
        %v576 = vsel %vm313, %v262, 0
        %v579 = vsel %vm313, %v263, 0
        %v582 = vsel %vm313, %v264, 0
        %v585 = vsel %vm313, %v265, 0
        %v588 = vsel %vm313, %v266, 0
        %v591 = vsel %vm313, %v267, 0
        %v594 = vsel %vm313, %v268, 0
        %v597 = vsel %vm313, %v269, 0
        %v600 = vsel %vm313, %v270, 0
        %v603 = vsel %vm313, %v271, 0
        %v606 = vsel %vm313, %v272, 0
        %v609 = vsel %vm313, %v273, 0
        %v612 = vsel %vm313, %v274, 0
        %v615 = vsel %vm313, %v275, 0
        %v618 = vsel %vm313, %v276, 0
        %v621 = vsel %vm313, %v277, 0
        %v624 = vsel %vm410, %v278, 0
        %626 = vmatpush.msra.mxu0 0.0
        %627 = vmatpush.msra.mxu0 0.0
        %628 = vmatpush.msra.mxu0 0.0
        %629 = vmatpush.msra.mxu0 0.0
        %630 = vmatpush.msra.mxu0 0.0
        %631 = vmatpush.msra.mxu0 0.0
        %632 = vmatpush.msra.mxu0 0.0
        %633 = vmatpush.msra.mxu0 0.0
        %634 = vmatpush.msra.mxu0 0.0
        %635 = vmatpush.msra.mxu0 0.0
        %636 = vmatpush.msra.mxu0 0.0
        %637 = vmatpush.msra.mxu0 0.0
        %638 = vmatpush.msra.mxu0 0.0
        %639 = vmatpush.msra.mxu0 0.0
        %640 = vmatpush.msra.mxu0 0.0
        %641 = vmatpush.msra.mxu0 %v624
        %642 = vmatmul.f32.gmra.mxu0 %v528
        %v643 = vpop.f32.mrf.mxu0
        %v644 = vadd.f32 %v432, %v643
        %645 = vmatmul.f32.gmra.mxu0 %v531
        %v646 = vpop.f32.mrf.mxu0
        %v647 = vadd.f32 %v435, %v646
        %648 = vmatmul.f32.gmra.mxu0 %v534
        %v649 = vpop.f32.mrf.mxu0
        %v650 = vadd.f32 %v438, %v649
        %651 = vmatmul.f32.gmra.mxu0 %v537
        %v652 = vpop.f32.mrf.mxu0
        %v653 = vadd.f32 %v441, %v652
        %654 = vmatmul.f32.gmra.mxu0 %v540
        %v655 = vpop.f32.mrf.mxu0
        %v656 = vadd.f32 %v444, %v655
        %657 = vmatmul.f32.gmra.mxu0 %v543
        %v658 = vpop.f32.mrf.mxu0
        %v659 = vadd.f32 %v447, %v658
        %660 = vmatmul.f32.gmra.mxu0 %v546
        %v661 = vpop.f32.mrf.mxu0
        %v662 = vadd.f32 %v450, %v661
        %663 = vmatmul.f32.gmra.mxu0 %v549
        %v664 = vpop.f32.mrf.mxu0
        %v665 = vadd.f32 %v453, %v664
        %666 = vmatmul.f32.gmra.mxu0 %v552
        %v667 = vpop.f32.mrf.mxu0
        %v668 = vadd.f32 %v456, %v667
        %669 = vmatmul.f32.gmra.mxu0 %v555
        %v670 = vpop.f32.mrf.mxu0
        %v671 = vadd.f32 %v459, %v670
        %672 = vmatmul.f32.gmra.mxu0 %v558
        %v673 = vpop.f32.mrf.mxu0
        %v674 = vadd.f32 %v462, %v673
        %675 = vmatmul.f32.gmra.mxu0 %v561
        %v676 = vpop.f32.mrf.mxu0
        %v677 = vadd.f32 %v465, %v676
        %678 = vmatmul.f32.gmra.mxu0 %v564
        %v679 = vpop.f32.mrf.mxu0
        %v680 = vadd.f32 %v468, %v679
        %681 = vmatmul.f32.gmra.mxu0 %v567
        %v682 = vpop.f32.mrf.mxu0
        %v683 = vadd.f32 %v471, %v682
        %684 = vmatmul.f32.gmra.mxu0 %v570
        %v685 = vpop.f32.mrf.mxu0
        %v686 = vadd.f32 %v474, %v685
        %687 = vmatmul.f32.gmra.mxu0 %v573
        %v688 = vpop.f32.mrf.mxu0
        %v689 = vadd.f32 %v477, %v688
        %690 = vmatmul.f32.gmra.mxu0 %v576
        %v691 = vpop.f32.mrf.mxu0
        %v692 = vadd.f32 %v480, %v691
        %693 = vmatmul.f32.gmra.mxu0 %v579
        %v694 = vpop.f32.mrf.mxu0
        %v695 = vadd.f32 %v483, %v694
        %696 = vmatmul.f32.gmra.mxu0 %v582
        %v697 = vpop.f32.mrf.mxu0
        %v698 = vadd.f32 %v486, %v697
        %699 = vmatmul.f32.gmra.mxu0 %v585
        %v700 = vpop.f32.mrf.mxu0
        %v701 = vadd.f32 %v489, %v700
        %702 = vmatmul.f32.gmra.mxu0 %v588
        %v703 = vpop.f32.mrf.mxu0
        %v704 = vadd.f32 %v492, %v703
        %705 = vmatmul.f32.gmra.mxu0 %v591
        %v706 = vpop.f32.mrf.mxu0
        %v707 = vadd.f32 %v495, %v706
        %708 = vmatmul.f32.gmra.mxu0 %v594
        %v709 = vpop.f32.mrf.mxu0
        %v710 = vadd.f32 %v498, %v709
        %711 = vmatmul.f32.gmra.mxu0 %v597
        %v712 = vpop.f32.mrf.mxu0
        %v713 = vadd.f32 %v501, %v712
        %714 = vmatmul.f32.gmra.mxu0 %v600
        %v715 = vpop.f32.mrf.mxu0
        %v716 = vadd.f32 %v504, %v715
        %717 = vmatmul.f32.gmra.mxu0 %v603
        %v718 = vpop.f32.mrf.mxu0
        %v719 = vadd.f32 %v507, %v718
        %720 = vmatmul.f32.gmra.mxu0 %v606
        %v721 = vpop.f32.mrf.mxu0
        %v722 = vadd.f32 %v510, %v721
        %723 = vmatmul.f32.gmra.mxu0 %v609
        %v724 = vpop.f32.mrf.mxu0
        %v725 = vadd.f32 %v513, %v724
        %726 = vmatmul.f32.gmra.mxu0 %v612
        %v727 = vpop.f32.mrf.mxu0
        %v728 = vadd.f32 %v516, %v727
        %729 = vmatmul.f32.gmra.mxu0 %v615
        %v730 = vpop.f32.mrf.mxu0
        %v731 = vadd.f32 %v519, %v730
        %732 = vmatmul.f32.gmra.mxu0 %v618
        %v733 = vpop.f32.mrf.mxu0
        %v734 = vadd.f32 %v522, %v733
        %735 = vmatmul.f32.gmra.mxu0 %v621
        %v736 = vpop.f32.mrf.mxu0
        %v737 = vadd.f32 %v525, %v736
        %738 = vdwg.mxu0
        %v739 = vld [vmem:[%s238 + $0x2] sm:$0xff]
        %v740 = vld [vmem:[%s238 + $0xa] sm:$0xff]
        %v741 = vld [vmem:[%s238 + $0x1a] sm:$0xff]
        %v742 = vld [vmem:[%s238 + $0x22] sm:$0xff]
        %v743 = vld [vmem:[%s238 + $0x32] sm:$0xff]
        %v744 = vld [vmem:[%s238 + $0x3a] sm:$0xff]
        %v745 = vld [vmem:[%s238 + $0x4a] sm:$0xff]
        %v746 = vld [vmem:[%s238 + $0x52] sm:$0xff]
        %v747 = vld [vmem:[%s238 + $0x62] sm:$0xff]
        %v748 = vld [vmem:[%s238 + $0x6a] sm:$0xff]
        %v749 = vld [vmem:[%s238 + $0x7a] sm:$0xff]
        %v750 = vld [vmem:[%s238 + $0x82] sm:$0xff]
        %v751 = vld [vmem:[%s238 + $0x92] sm:$0xff]
        %v752 = vld [vmem:[%s238 + $0x9a] sm:$0xff]
        %v753 = vld [vmem:[%s238 + $0xaa] sm:$0xff]
        %v754 = vld [vmem:[%s238 + $0xb2] sm:$0xff]
        %v755 = vld [vmem:[%s238 + $0xc2] sm:$0xff]
        %v756 = vld [vmem:[%s238 + $0xca] sm:$0xff]
        %v757 = vld [vmem:[%s238 + $0xda] sm:$0xff]
        %v758 = vld [vmem:[%s238 + $0xe2] sm:$0xff]
        %v759 = vld [vmem:[%s238 + $0xf2] sm:$0xff]
        %v760 = vld [vmem:[%s238 + $0xfa] sm:$0xff]
        %v761 = vld [vmem:[%s238 + $0x10a] sm:$0xff]
        %v762 = vld [vmem:[%s238 + $0x112] sm:$0xff]
        %v763 = vld [vmem:[%s238 + $0x122] sm:$0xff]
        %v764 = vld [vmem:[%s238 + $0x12a] sm:$0xff]
        %v765 = vld [vmem:[%s238 + $0x13a] sm:$0xff]
        %v766 = vld [vmem:[%s238 + $0x142] sm:$0xff]
        %v767 = vld [vmem:[%s238 + $0x152] sm:$0xff]
        %v768 = vld [vmem:[%s238 + $0x15a] sm:$0xff]
        %v769 = vld [vmem:[%s238 + $0x16a] sm:$0xff]
        %v770 = vld [vmem:[%s238 + $0x172] sm:$0xff]
        %s771 = scalar_lea.vmem %s1, 8
        %v772 = vld [vmem:[%s771] sm:$0xf]
        %v774 = vsel %vm313, %v739, 0
        %v777 = vsel %vm313, %v740, 0
        %v780 = vsel %vm313, %v741, 0
        %v783 = vsel %vm313, %v742, 0
        %v786 = vsel %vm313, %v743, 0
        %v789 = vsel %vm313, %v744, 0
        %v792 = vsel %vm313, %v745, 0
        %v795 = vsel %vm313, %v746, 0
        %v798 = vsel %vm313, %v747, 0
        %v801 = vsel %vm313, %v748, 0
        %v804 = vsel %vm313, %v749, 0
        %v807 = vsel %vm313, %v750, 0
        %v810 = vsel %vm313, %v751, 0
        %v813 = vsel %vm313, %v752, 0
        %v816 = vsel %vm313, %v753, 0
        %v819 = vsel %vm313, %v754, 0
        %v822 = vsel %vm313, %v755, 0
        %v825 = vsel %vm313, %v756, 0
        %v828 = vsel %vm313, %v757, 0
        %v831 = vsel %vm313, %v758, 0
        %v834 = vsel %vm313, %v759, 0
        %v837 = vsel %vm313, %v760, 0
        %v840 = vsel %vm313, %v761, 0
        %v843 = vsel %vm313, %v762, 0
        %v846 = vsel %vm313, %v763, 0
        %v849 = vsel %vm313, %v764, 0
        %v852 = vsel %vm313, %v765, 0
        %v855 = vsel %vm313, %v766, 0
        %v858 = vsel %vm313, %v767, 0
        %v861 = vsel %vm313, %v768, 0
        %v864 = vsel %vm313, %v769, 0
        %v867 = vsel %vm313, %v770, 0
        %v870 = vsel %vm410, %v772, 0
        %872 = vmatpush.msra.mxu0 0.0
        %873 = vmatpush.msra.mxu0 0.0
        %874 = vmatpush.msra.mxu0 0.0
        %875 = vmatpush.msra.mxu0 0.0
        %876 = vmatpush.msra.mxu0 0.0
        %877 = vmatpush.msra.mxu0 0.0
        %878 = vmatpush.msra.mxu0 0.0
        %879 = vmatpush.msra.mxu0 0.0
        %880 = vmatpush.msra.mxu0 0.0
        %881 = vmatpush.msra.mxu0 0.0
        %882 = vmatpush.msra.mxu0 0.0
        %883 = vmatpush.msra.mxu0 0.0
        %884 = vmatpush.msra.mxu0 0.0
        %885 = vmatpush.msra.mxu0 0.0
        %886 = vmatpush.msra.mxu0 0.0
        %887 = vmatpush.msra.mxu0 %v870
        %888 = vmatmul.f32.gmra.mxu0 %v774
        %v889 = vpop.f32.mrf.mxu0
        %v890 = vadd.f32 0.0, %v889
        %891 = vmatmul.f32.gmra.mxu0 %v777
        %v892 = vpop.f32.mrf.mxu0
        %v893 = vadd.f32 0.0, %v892
        %894 = vmatmul.f32.gmra.mxu0 %v780
        %v895 = vpop.f32.mrf.mxu0
        %v896 = vadd.f32 0.0, %v895
        %897 = vmatmul.f32.gmra.mxu0 %v783
        %v898 = vpop.f32.mrf.mxu0
        %v899 = vadd.f32 0.0, %v898
        %900 = vmatmul.f32.gmra.mxu0 %v786
        %v901 = vpop.f32.mrf.mxu0
        %v902 = vadd.f32 0.0, %v901
        %903 = vmatmul.f32.gmra.mxu0 %v789
        %v904 = vpop.f32.mrf.mxu0
        %v905 = vadd.f32 0.0, %v904
        %906 = vmatmul.f32.gmra.mxu0 %v792
        %v907 = vpop.f32.mrf.mxu0
        %v908 = vadd.f32 0.0, %v907
        %909 = vmatmul.f32.gmra.mxu0 %v795
        %v910 = vpop.f32.mrf.mxu0
        %v911 = vadd.f32 0.0, %v910
        %912 = vmatmul.f32.gmra.mxu0 %v798
        %v913 = vpop.f32.mrf.mxu0
        %v914 = vadd.f32 0.0, %v913
        %915 = vmatmul.f32.gmra.mxu0 %v801
        %v916 = vpop.f32.mrf.mxu0
        %v917 = vadd.f32 0.0, %v916
        %918 = vmatmul.f32.gmra.mxu0 %v804
        %v919 = vpop.f32.mrf.mxu0
        %v920 = vadd.f32 0.0, %v919
        %921 = vmatmul.f32.gmra.mxu0 %v807
        %v922 = vpop.f32.mrf.mxu0
        %v923 = vadd.f32 0.0, %v922
        %924 = vmatmul.f32.gmra.mxu0 %v810
        %v925 = vpop.f32.mrf.mxu0
        %v926 = vadd.f32 0.0, %v925
        %927 = vmatmul.f32.gmra.mxu0 %v813
        %v928 = vpop.f32.mrf.mxu0
        %v929 = vadd.f32 0.0, %v928
        %930 = vmatmul.f32.gmra.mxu0 %v816
        %v931 = vpop.f32.mrf.mxu0
        %v932 = vadd.f32 0.0, %v931
        %933 = vmatmul.f32.gmra.mxu0 %v819
        %v934 = vpop.f32.mrf.mxu0
        %v935 = vadd.f32 0.0, %v934
        %936 = vmatmul.f32.gmra.mxu0 %v822
        %v937 = vpop.f32.mrf.mxu0
        %v938 = vadd.f32 0.0, %v937
        %939 = vmatmul.f32.gmra.mxu0 %v825
        %v940 = vpop.f32.mrf.mxu0
        %v941 = vadd.f32 0.0, %v940
        %942 = vmatmul.f32.gmra.mxu0 %v828
        %v943 = vpop.f32.mrf.mxu0
        %v944 = vadd.f32 0.0, %v943
        %945 = vmatmul.f32.gmra.mxu0 %v831
        %v946 = vpop.f32.mrf.mxu0
        %v947 = vadd.f32 0.0, %v946
        %948 = vmatmul.f32.gmra.mxu0 %v834
        %v949 = vpop.f32.mrf.mxu0
        %v950 = vadd.f32 0.0, %v949
        %951 = vmatmul.f32.gmra.mxu0 %v837
        %v952 = vpop.f32.mrf.mxu0
        %v953 = vadd.f32 0.0, %v952
        %954 = vmatmul.f32.gmra.mxu0 %v840
        %v955 = vpop.f32.mrf.mxu0
        %v956 = vadd.f32 0.0, %v955
        %957 = vmatmul.f32.gmra.mxu0 %v843
        %v958 = vpop.f32.mrf.mxu0
        %v959 = vadd.f32 0.0, %v958
        %960 = vmatmul.f32.gmra.mxu0 %v846
        %v961 = vpop.f32.mrf.mxu0
        %v962 = vadd.f32 0.0, %v961
        %963 = vmatmul.f32.gmra.mxu0 %v849
        %v964 = vpop.f32.mrf.mxu0
        %v965 = vadd.f32 0.0, %v964
        %966 = vmatmul.f32.gmra.mxu0 %v852
        %v967 = vpop.f32.mrf.mxu0
        %v968 = vadd.f32 0.0, %v967
        %969 = vmatmul.f32.gmra.mxu0 %v855
        %v970 = vpop.f32.mrf.mxu0
        %v971 = vadd.f32 0.0, %v970
        %972 = vmatmul.f32.gmra.mxu0 %v858
        %v973 = vpop.f32.mrf.mxu0
        %v974 = vadd.f32 0.0, %v973
        %975 = vmatmul.f32.gmra.mxu0 %v861
        %v976 = vpop.f32.mrf.mxu0
        %v977 = vadd.f32 0.0, %v976
        %978 = vmatmul.f32.gmra.mxu0 %v864
        %v979 = vpop.f32.mrf.mxu0
        %v980 = vadd.f32 0.0, %v979
        %981 = vmatmul.f32.gmra.mxu0 %v867
        %v982 = vpop.f32.mrf.mxu0
        %v983 = vadd.f32 0.0, %v982
        %984 = vdwg.mxu0
        %v985 = vadd.f32 %v644, %v890
        %v986 = vadd.f32 %v647, %v893
        %v987 = vadd.f32 %v650, %v896
        %v988 = vadd.f32 %v653, %v899
        %v989 = vadd.f32 %v656, %v902
        %v990 = vadd.f32 %v659, %v905
        %v991 = vadd.f32 %v662, %v908
        %v992 = vadd.f32 %v665, %v911
        %v993 = vadd.f32 %v668, %v914
        %v994 = vadd.f32 %v671, %v917
        %v995 = vadd.f32 %v674, %v920
        %v996 = vadd.f32 %v677, %v923
        %v997 = vadd.f32 %v680, %v926
        %v998 = vadd.f32 %v683, %v929
        %v999 = vadd.f32 %v686, %v932
        %v1000 = vadd.f32 %v689, %v935
        %v1001 = vadd.f32 %v692, %v938
        %v1002 = vadd.f32 %v695, %v941
        %v1003 = vadd.f32 %v698, %v944
        %v1004 = vadd.f32 %v701, %v947
        %v1005 = vadd.f32 %v704, %v950
        %v1006 = vadd.f32 %v707, %v953
        %v1007 = vadd.f32 %v710, %v956
        %v1008 = vadd.f32 %v713, %v959
        %v1009 = vadd.f32 %v716, %v962
        %v1010 = vadd.f32 %v719, %v965
        %v1011 = vadd.f32 %v722, %v968
        %v1012 = vadd.f32 %v725, %v971
        %v1013 = vadd.f32 %v728, %v974
        %v1014 = vadd.f32 %v731, %v977
        %v1015 = vadd.f32 %v734, %v980
        %v1016 = vadd.f32 %v737, %v983
        %s1017 = scalar_lea.vmem %s238, 24
        %v1018 = vld [vmem:[%s1017] sm:$0xff]
        %v1019 = vld [vmem:[%s1017 + $0x8] sm:$0xff]
        %v1020 = vld [vmem:[%s1017 + $0x18] sm:$0xff]
        %v1021 = vld [vmem:[%s1017 + $0x20] sm:$0xff]
        %v1022 = vld [vmem:[%s1017 + $0x30] sm:$0xff]
        %v1023 = vld [vmem:[%s1017 + $0x38] sm:$0xff]
        %v1024 = vld [vmem:[%s1017 + $0x48] sm:$0xff]
        %v1025 = vld [vmem:[%s1017 + $0x50] sm:$0xff]
        %v1026 = vld [vmem:[%s1017 + $0x60] sm:$0xff]
        %v1027 = vld [vmem:[%s1017 + $0x68] sm:$0xff]
        %v1028 = vld [vmem:[%s1017 + $0x78] sm:$0xff]
        %v1029 = vld [vmem:[%s1017 + $0x80] sm:$0xff]
        %v1030 = vld [vmem:[%s1017 + $0x90] sm:$0xff]
        %v1031 = vld [vmem:[%s1017 + $0x98] sm:$0xff]
        %v1032 = vld [vmem:[%s1017 + $0xa8] sm:$0xff]
        %v1033 = vld [vmem:[%s1017 + $0xb0] sm:$0xff]
        %v1034 = vld [vmem:[%s1017 + $0xc0] sm:$0xff]
        %v1035 = vld [vmem:[%s1017 + $0xc8] sm:$0xff]
        %v1036 = vld [vmem:[%s1017 + $0xd8] sm:$0xff]
        %v1037 = vld [vmem:[%s1017 + $0xe0] sm:$0xff]
        %v1038 = vld [vmem:[%s1017 + $0xf0] sm:$0xff]
        %v1039 = vld [vmem:[%s1017 + $0xf8] sm:$0xff]
        %v1040 = vld [vmem:[%s1017 + $0x108] sm:$0xff]
        %v1041 = vld [vmem:[%s1017 + $0x110] sm:$0xff]
        %v1042 = vld [vmem:[%s1017 + $0x120] sm:$0xff]
        %v1043 = vld [vmem:[%s1017 + $0x128] sm:$0xff]
        %v1044 = vld [vmem:[%s1017 + $0x138] sm:$0xff]
        %v1045 = vld [vmem:[%s1017 + $0x140] sm:$0xff]
        %v1046 = vld [vmem:[%s1017 + $0x150] sm:$0xff]
        %v1047 = vld [vmem:[%s1017 + $0x158] sm:$0xff]
        %v1048 = vld [vmem:[%s1017 + $0x168] sm:$0xff]
        %v1049 = vld [vmem:[%s1017 + $0x170] sm:$0xff]
        %s1050 = scalar_lea.vmem %s1, 12
        %v1051 = vld [vmem:[%s1050] sm:$0xf]
        %v1053 = vsel %vm313, %v1018, 0
        %v1056 = vsel %vm313, %v1019, 0
        %v1059 = vsel %vm313, %v1020, 0
        %v1062 = vsel %vm313, %v1021, 0
        %v1065 = vsel %vm313, %v1022, 0
        %v1068 = vsel %vm313, %v1023, 0
        %v1071 = vsel %vm313, %v1024, 0
        %v1074 = vsel %vm313, %v1025, 0
        %v1077 = vsel %vm313, %v1026, 0
        %v1080 = vsel %vm313, %v1027, 0
        %v1083 = vsel %vm313, %v1028, 0
        %v1086 = vsel %vm313, %v1029, 0
        %v1089 = vsel %vm313, %v1030, 0
        %v1092 = vsel %vm313, %v1031, 0
        %v1095 = vsel %vm313, %v1032, 0
        %v1098 = vsel %vm313, %v1033, 0
        %v1101 = vsel %vm313, %v1034, 0
        %v1104 = vsel %vm313, %v1035, 0
        %v1107 = vsel %vm313, %v1036, 0
        %v1110 = vsel %vm313, %v1037, 0
        %v1113 = vsel %vm313, %v1038, 0
        %v1116 = vsel %vm313, %v1039, 0
        %v1119 = vsel %vm313, %v1040, 0
        %v1122 = vsel %vm313, %v1041, 0
        %v1125 = vsel %vm313, %v1042, 0
        %v1128 = vsel %vm313, %v1043, 0
        %v1131 = vsel %vm313, %v1044, 0
        %v1134 = vsel %vm313, %v1045, 0
        %v1137 = vsel %vm313, %v1046, 0
        %v1140 = vsel %vm313, %v1047, 0
        %v1143 = vsel %vm313, %v1048, 0
        %v1146 = vsel %vm313, %v1049, 0
        %v1149 = vsel %vm410, %v1051, 0
        %1151 = vmatpush.msra.mxu0 0.0
        %1152 = vmatpush.msra.mxu0 0.0
        %1153 = vmatpush.msra.mxu0 0.0
        %1154 = vmatpush.msra.mxu0 0.0
        %1155 = vmatpush.msra.mxu0 0.0
        %1156 = vmatpush.msra.mxu0 0.0
        %1157 = vmatpush.msra.mxu0 0.0
        %1158 = vmatpush.msra.mxu0 0.0
        %1159 = vmatpush.msra.mxu0 0.0
        %1160 = vmatpush.msra.mxu0 0.0
        %1161 = vmatpush.msra.mxu0 0.0
        %1162 = vmatpush.msra.mxu0 0.0
        %1163 = vmatpush.msra.mxu0 0.0
        %1164 = vmatpush.msra.mxu0 0.0
        %1165 = vmatpush.msra.mxu0 0.0
        %1166 = vmatpush.msra.mxu0 %v1149
        %1167 = vmatmul.f32.gmra.mxu0 %v1053
        %v1168 = vpop.f32.mrf.mxu0
        %v1169 = vadd.f32 0.0, %v1168
        %1170 = vmatmul.f32.gmra.mxu0 %v1056
        %v1171 = vpop.f32.mrf.mxu0
        %v1172 = vadd.f32 0.0, %v1171
        %1173 = vmatmul.f32.gmra.mxu0 %v1059
        %v1174 = vpop.f32.mrf.mxu0
        %v1175 = vadd.f32 0.0, %v1174
        %1176 = vmatmul.f32.gmra.mxu0 %v1062
        %v1177 = vpop.f32.mrf.mxu0
        %v1178 = vadd.f32 0.0, %v1177
        %1179 = vmatmul.f32.gmra.mxu0 %v1065
        %v1180 = vpop.f32.mrf.mxu0
        %v1181 = vadd.f32 0.0, %v1180
        %1182 = vmatmul.f32.gmra.mxu0 %v1068
        %v1183 = vpop.f32.mrf.mxu0
        %v1184 = vadd.f32 0.0, %v1183
        %1185 = vmatmul.f32.gmra.mxu0 %v1071
        %v1186 = vpop.f32.mrf.mxu0
        %v1187 = vadd.f32 0.0, %v1186
        %1188 = vmatmul.f32.gmra.mxu0 %v1074
        %v1189 = vpop.f32.mrf.mxu0
        %v1190 = vadd.f32 0.0, %v1189
        %1191 = vmatmul.f32.gmra.mxu0 %v1077
        %v1192 = vpop.f32.mrf.mxu0
        %v1193 = vadd.f32 0.0, %v1192
        %1194 = vmatmul.f32.gmra.mxu0 %v1080
        %v1195 = vpop.f32.mrf.mxu0
        %v1196 = vadd.f32 0.0, %v1195
        %1197 = vmatmul.f32.gmra.mxu0 %v1083
        %v1198 = vpop.f32.mrf.mxu0
        %v1199 = vadd.f32 0.0, %v1198
        %1200 = vmatmul.f32.gmra.mxu0 %v1086
        %v1201 = vpop.f32.mrf.mxu0
        %v1202 = vadd.f32 0.0, %v1201
        %1203 = vmatmul.f32.gmra.mxu0 %v1089
        %v1204 = vpop.f32.mrf.mxu0
        %v1205 = vadd.f32 0.0, %v1204
        %1206 = vmatmul.f32.gmra.mxu0 %v1092
        %v1207 = vpop.f32.mrf.mxu0
        %v1208 = vadd.f32 0.0, %v1207
        %1209 = vmatmul.f32.gmra.mxu0 %v1095
        %v1210 = vpop.f32.mrf.mxu0
        %v1211 = vadd.f32 0.0, %v1210
        %1212 = vmatmul.f32.gmra.mxu0 %v1098
        %v1213 = vpop.f32.mrf.mxu0
        %v1214 = vadd.f32 0.0, %v1213
        %1215 = vmatmul.f32.gmra.mxu0 %v1101
        %v1216 = vpop.f32.mrf.mxu0
        %v1217 = vadd.f32 0.0, %v1216
        %1218 = vmatmul.f32.gmra.mxu0 %v1104
        %v1219 = vpop.f32.mrf.mxu0
        %v1220 = vadd.f32 0.0, %v1219
        %1221 = vmatmul.f32.gmra.mxu0 %v1107
        %v1222 = vpop.f32.mrf.mxu0
        %v1223 = vadd.f32 0.0, %v1222
        %1224 = vmatmul.f32.gmra.mxu0 %v1110
        %v1225 = vpop.f32.mrf.mxu0
        %v1226 = vadd.f32 0.0, %v1225
        %1227 = vmatmul.f32.gmra.mxu0 %v1113
        %v1228 = vpop.f32.mrf.mxu0
        %v1229 = vadd.f32 0.0, %v1228
        %1230 = vmatmul.f32.gmra.mxu0 %v1116
        %v1231 = vpop.f32.mrf.mxu0
        %v1232 = vadd.f32 0.0, %v1231
        %1233 = vmatmul.f32.gmra.mxu0 %v1119
        %v1234 = vpop.f32.mrf.mxu0
        %v1235 = vadd.f32 0.0, %v1234
        %1236 = vmatmul.f32.gmra.mxu0 %v1122
        %v1237 = vpop.f32.mrf.mxu0
        %v1238 = vadd.f32 0.0, %v1237
        %1239 = vmatmul.f32.gmra.mxu0 %v1125
        %v1240 = vpop.f32.mrf.mxu0
        %v1241 = vadd.f32 0.0, %v1240
        %1242 = vmatmul.f32.gmra.mxu0 %v1128
        %v1243 = vpop.f32.mrf.mxu0
        %v1244 = vadd.f32 0.0, %v1243
        %1245 = vmatmul.f32.gmra.mxu0 %v1131
        %v1246 = vpop.f32.mrf.mxu0
        %v1247 = vadd.f32 0.0, %v1246
        %1248 = vmatmul.f32.gmra.mxu0 %v1134
        %v1249 = vpop.f32.mrf.mxu0
        %v1250 = vadd.f32 0.0, %v1249
        %1251 = vmatmul.f32.gmra.mxu0 %v1137
        %v1252 = vpop.f32.mrf.mxu0
        %v1253 = vadd.f32 0.0, %v1252
        %1254 = vmatmul.f32.gmra.mxu0 %v1140
        %v1255 = vpop.f32.mrf.mxu0
        %v1256 = vadd.f32 0.0, %v1255
        %1257 = vmatmul.f32.gmra.mxu0 %v1143
        %v1258 = vpop.f32.mrf.mxu0
        %v1259 = vadd.f32 0.0, %v1258
        %1260 = vmatmul.f32.gmra.mxu0 %v1146
        %v1261 = vpop.f32.mrf.mxu0
        %v1262 = vadd.f32 0.0, %v1261
        %1263 = vdwg.mxu0
        %v1264 = vadd.f32 %v985, %v1169
        %v1265 = vadd.f32 %v986, %v1172
        %v1266 = vadd.f32 %v987, %v1175
        %v1267 = vadd.f32 %v988, %v1178
        %v1268 = vadd.f32 %v989, %v1181
        %v1269 = vadd.f32 %v990, %v1184
        %v1270 = vadd.f32 %v991, %v1187
        %v1271 = vadd.f32 %v992, %v1190
        %v1272 = vadd.f32 %v993, %v1193
        %v1273 = vadd.f32 %v994, %v1196
        %v1274 = vadd.f32 %v995, %v1199
        %v1275 = vadd.f32 %v996, %v1202
        %v1276 = vadd.f32 %v997, %v1205
        %v1277 = vadd.f32 %v998, %v1208
        %v1278 = vadd.f32 %v999, %v1211
        %v1279 = vadd.f32 %v1000, %v1214
        %v1280 = vadd.f32 %v1001, %v1217
        %v1281 = vadd.f32 %v1002, %v1220
        %v1282 = vadd.f32 %v1003, %v1223
        %v1283 = vadd.f32 %v1004, %v1226
        %v1284 = vadd.f32 %v1005, %v1229
        %v1285 = vadd.f32 %v1006, %v1232
        %v1286 = vadd.f32 %v1007, %v1235
        %v1287 = vadd.f32 %v1008, %v1238
        %v1288 = vadd.f32 %v1009, %v1241
        %v1289 = vadd.f32 %v1010, %v1244
        %v1290 = vadd.f32 %v1011, %v1247
        %v1291 = vadd.f32 %v1012, %v1250
        %v1292 = vadd.f32 %v1013, %v1253
        %v1293 = vadd.f32 %v1014, %v1256
        %v1294 = vadd.f32 %v1015, %v1259
        %v1295 = vadd.f32 %v1016, %v1262
        %v1296 = vld [vmem:[%s1017 + $0x1] sm:$0xff]
        %v1297 = vld [vmem:[%s1017 + $0x9] sm:$0xff]
        %v1298 = vld [vmem:[%s1017 + $0x19] sm:$0xff]
        %v1299 = vld [vmem:[%s1017 + $0x21] sm:$0xff]
        %v1300 = vld [vmem:[%s1017 + $0x31] sm:$0xff]
        %v1301 = vld [vmem:[%s1017 + $0x39] sm:$0xff]
        %v1302 = vld [vmem:[%s1017 + $0x49] sm:$0xff]
        %v1303 = vld [vmem:[%s1017 + $0x51] sm:$0xff]
        %v1304 = vld [vmem:[%s1017 + $0x61] sm:$0xff]
        %v1305 = vld [vmem:[%s1017 + $0x69] sm:$0xff]
        %v1306 = vld [vmem:[%s1017 + $0x79] sm:$0xff]
        %v1307 = vld [vmem:[%s1017 + $0x81] sm:$0xff]
        %v1308 = vld [vmem:[%s1017 + $0x91] sm:$0xff]
        %v1309 = vld [vmem:[%s1017 + $0x99] sm:$0xff]
        %v1310 = vld [vmem:[%s1017 + $0xa9] sm:$0xff]
        %v1311 = vld [vmem:[%s1017 + $0xb1] sm:$0xff]
        %v1312 = vld [vmem:[%s1017 + $0xc1] sm:$0xff]
        %v1313 = vld [vmem:[%s1017 + $0xc9] sm:$0xff]
        %v1314 = vld [vmem:[%s1017 + $0xd9] sm:$0xff]
        %v1315 = vld [vmem:[%s1017 + $0xe1] sm:$0xff]
        %v1316 = vld [vmem:[%s1017 + $0xf1] sm:$0xff]
        %v1317 = vld [vmem:[%s1017 + $0xf9] sm:$0xff]
        %v1318 = vld [vmem:[%s1017 + $0x109] sm:$0xff]
        %v1319 = vld [vmem:[%s1017 + $0x111] sm:$0xff]
        %v1320 = vld [vmem:[%s1017 + $0x121] sm:$0xff]
        %v1321 = vld [vmem:[%s1017 + $0x129] sm:$0xff]
        %v1322 = vld [vmem:[%s1017 + $0x139] sm:$0xff]
        %v1323 = vld [vmem:[%s1017 + $0x141] sm:$0xff]
        %v1324 = vld [vmem:[%s1017 + $0x151] sm:$0xff]
        %v1325 = vld [vmem:[%s1017 + $0x159] sm:$0xff]
        %v1326 = vld [vmem:[%s1017 + $0x169] sm:$0xff]
        %v1327 = vld [vmem:[%s1017 + $0x171] sm:$0xff]
        %s1328 = scalar_lea.vmem %s1, 16
        %v1329 = vld [vmem:[%s1328] sm:$0xf]
        %v1331 = vsel %vm313, %v1296, 0
        %v1334 = vsel %vm313, %v1297, 0
        %v1337 = vsel %vm313, %v1298, 0
        %v1340 = vsel %vm313, %v1299, 0
        %v1343 = vsel %vm313, %v1300, 0
        %v1346 = vsel %vm313, %v1301, 0
        %v1349 = vsel %vm313, %v1302, 0
        %v1352 = vsel %vm313, %v1303, 0
        %v1355 = vsel %vm313, %v1304, 0
        %v1358 = vsel %vm313, %v1305, 0
        %v1361 = vsel %vm313, %v1306, 0
        %v1364 = vsel %vm313, %v1307, 0
        %v1367 = vsel %vm313, %v1308, 0
        %v1370 = vsel %vm313, %v1309, 0
        %v1373 = vsel %vm313, %v1310, 0
        %v1376 = vsel %vm313, %v1311, 0
        %v1379 = vsel %vm313, %v1312, 0
        %v1382 = vsel %vm313, %v1313, 0
        %v1385 = vsel %vm313, %v1314, 0
        %v1388 = vsel %vm313, %v1315, 0
        %v1391 = vsel %vm313, %v1316, 0
        %v1394 = vsel %vm313, %v1317, 0
        %v1397 = vsel %vm313, %v1318, 0
        %v1400 = vsel %vm313, %v1319, 0
        %v1403 = vsel %vm313, %v1320, 0
        %v1406 = vsel %vm313, %v1321, 0
        %v1409 = vsel %vm313, %v1322, 0
        %v1412 = vsel %vm313, %v1323, 0
        %v1415 = vsel %vm313, %v1324, 0
        %v1418 = vsel %vm313, %v1325, 0
        %v1421 = vsel %vm313, %v1326, 0
        %v1424 = vsel %vm313, %v1327, 0
        %v1427 = vsel %vm410, %v1329, 0
        %1429 = vmatpush.msra.mxu0 0.0
        %1430 = vmatpush.msra.mxu0 0.0
        %1431 = vmatpush.msra.mxu0 0.0
        %1432 = vmatpush.msra.mxu0 0.0
        %1433 = vmatpush.msra.mxu0 0.0
        %1434 = vmatpush.msra.mxu0 0.0
        %1435 = vmatpush.msra.mxu0 0.0
        %1436 = vmatpush.msra.mxu0 0.0
        %1437 = vmatpush.msra.mxu0 0.0
        %1438 = vmatpush.msra.mxu0 0.0
        %1439 = vmatpush.msra.mxu0 0.0
        %1440 = vmatpush.msra.mxu0 0.0
        %1441 = vmatpush.msra.mxu0 0.0
        %1442 = vmatpush.msra.mxu0 0.0
        %1443 = vmatpush.msra.mxu0 0.0
        %1444 = vmatpush.msra.mxu0 %v1427
        %1445 = vmatmul.f32.gmra.mxu0 %v1331
        %v1446 = vpop.f32.mrf.mxu0
        %v1447 = vadd.f32 0.0, %v1446
        %1448 = vmatmul.f32.gmra.mxu0 %v1334
        %v1449 = vpop.f32.mrf.mxu0
        %v1450 = vadd.f32 0.0, %v1449
        %1451 = vmatmul.f32.gmra.mxu0 %v1337
        %v1452 = vpop.f32.mrf.mxu0
        %v1453 = vadd.f32 0.0, %v1452
        %1454 = vmatmul.f32.gmra.mxu0 %v1340
        %v1455 = vpop.f32.mrf.mxu0
        %v1456 = vadd.f32 0.0, %v1455
        %1457 = vmatmul.f32.gmra.mxu0 %v1343
        %v1458 = vpop.f32.mrf.mxu0
        %v1459 = vadd.f32 0.0, %v1458
        %1460 = vmatmul.f32.gmra.mxu0 %v1346
        %v1461 = vpop.f32.mrf.mxu0
        %v1462 = vadd.f32 0.0, %v1461
        %1463 = vmatmul.f32.gmra.mxu0 %v1349
        %v1464 = vpop.f32.mrf.mxu0
        %v1465 = vadd.f32 0.0, %v1464
        %1466 = vmatmul.f32.gmra.mxu0 %v1352
        %v1467 = vpop.f32.mrf.mxu0
        %v1468 = vadd.f32 0.0, %v1467
        %1469 = vmatmul.f32.gmra.mxu0 %v1355
        %v1470 = vpop.f32.mrf.mxu0
        %v1471 = vadd.f32 0.0, %v1470
        %1472 = vmatmul.f32.gmra.mxu0 %v1358
        %v1473 = vpop.f32.mrf.mxu0
        %v1474 = vadd.f32 0.0, %v1473
        %1475 = vmatmul.f32.gmra.mxu0 %v1361
        %v1476 = vpop.f32.mrf.mxu0
        %v1477 = vadd.f32 0.0, %v1476
        %1478 = vmatmul.f32.gmra.mxu0 %v1364
        %v1479 = vpop.f32.mrf.mxu0
        %v1480 = vadd.f32 0.0, %v1479
        %1481 = vmatmul.f32.gmra.mxu0 %v1367
        %v1482 = vpop.f32.mrf.mxu0
        %v1483 = vadd.f32 0.0, %v1482
        %1484 = vmatmul.f32.gmra.mxu0 %v1370
        %v1485 = vpop.f32.mrf.mxu0
        %v1486 = vadd.f32 0.0, %v1485
        %1487 = vmatmul.f32.gmra.mxu0 %v1373
        %v1488 = vpop.f32.mrf.mxu0
        %v1489 = vadd.f32 0.0, %v1488
        %1490 = vmatmul.f32.gmra.mxu0 %v1376
        %v1491 = vpop.f32.mrf.mxu0
        %v1492 = vadd.f32 0.0, %v1491
        %1493 = vmatmul.f32.gmra.mxu0 %v1379
        %v1494 = vpop.f32.mrf.mxu0
        %v1495 = vadd.f32 0.0, %v1494
        %1496 = vmatmul.f32.gmra.mxu0 %v1382
        %v1497 = vpop.f32.mrf.mxu0
        %v1498 = vadd.f32 0.0, %v1497
        %1499 = vmatmul.f32.gmra.mxu0 %v1385
        %v1500 = vpop.f32.mrf.mxu0
        %v1501 = vadd.f32 0.0, %v1500
        %1502 = vmatmul.f32.gmra.mxu0 %v1388
        %v1503 = vpop.f32.mrf.mxu0
        %v1504 = vadd.f32 0.0, %v1503
        %1505 = vmatmul.f32.gmra.mxu0 %v1391
        %v1506 = vpop.f32.mrf.mxu0
        %v1507 = vadd.f32 0.0, %v1506
        %1508 = vmatmul.f32.gmra.mxu0 %v1394
        %v1509 = vpop.f32.mrf.mxu0
        %v1510 = vadd.f32 0.0, %v1509
        %1511 = vmatmul.f32.gmra.mxu0 %v1397
        %v1512 = vpop.f32.mrf.mxu0
        %v1513 = vadd.f32 0.0, %v1512
        %1514 = vmatmul.f32.gmra.mxu0 %v1400
        %v1515 = vpop.f32.mrf.mxu0
        %v1516 = vadd.f32 0.0, %v1515
        %1517 = vmatmul.f32.gmra.mxu0 %v1403
        %v1518 = vpop.f32.mrf.mxu0
        %v1519 = vadd.f32 0.0, %v1518
        %1520 = vmatmul.f32.gmra.mxu0 %v1406
        %v1521 = vpop.f32.mrf.mxu0
        %v1522 = vadd.f32 0.0, %v1521
        %1523 = vmatmul.f32.gmra.mxu0 %v1409
        %v1524 = vpop.f32.mrf.mxu0
        %v1525 = vadd.f32 0.0, %v1524
        %1526 = vmatmul.f32.gmra.mxu0 %v1412
        %v1527 = vpop.f32.mrf.mxu0
        %v1528 = vadd.f32 0.0, %v1527
        %1529 = vmatmul.f32.gmra.mxu0 %v1415
        %v1530 = vpop.f32.mrf.mxu0
        %v1531 = vadd.f32 0.0, %v1530
        %1532 = vmatmul.f32.gmra.mxu0 %v1418
        %v1533 = vpop.f32.mrf.mxu0
        %v1534 = vadd.f32 0.0, %v1533
        %1535 = vmatmul.f32.gmra.mxu0 %v1421
        %v1536 = vpop.f32.mrf.mxu0
        %v1537 = vadd.f32 0.0, %v1536
        %1538 = vmatmul.f32.gmra.mxu0 %v1424
        %v1539 = vpop.f32.mrf.mxu0
        %v1540 = vadd.f32 0.0, %v1539
        %1541 = vdwg.mxu0
        %v1542 = vadd.f32 %v1264, %v1447
        %v1543 = vadd.f32 %v1265, %v1450
        %v1544 = vadd.f32 %v1266, %v1453
        %v1545 = vadd.f32 %v1267, %v1456
        %v1546 = vadd.f32 %v1268, %v1459
        %v1547 = vadd.f32 %v1269, %v1462
        %v1548 = vadd.f32 %v1270, %v1465
        %v1549 = vadd.f32 %v1271, %v1468
        %v1550 = vadd.f32 %v1272, %v1471
        %v1551 = vadd.f32 %v1273, %v1474
        %v1552 = vadd.f32 %v1274, %v1477
        %v1553 = vadd.f32 %v1275, %v1480
        %v1554 = vadd.f32 %v1276, %v1483
        %v1555 = vadd.f32 %v1277, %v1486
        %v1556 = vadd.f32 %v1278, %v1489
        %v1557 = vadd.f32 %v1279, %v1492
        %v1558 = vadd.f32 %v1280, %v1495
        %v1559 = vadd.f32 %v1281, %v1498
        %v1560 = vadd.f32 %v1282, %v1501
        %v1561 = vadd.f32 %v1283, %v1504
        %v1562 = vadd.f32 %v1284, %v1507
        %v1563 = vadd.f32 %v1285, %v1510
        %v1564 = vadd.f32 %v1286, %v1513
        %v1565 = vadd.f32 %v1287, %v1516
        %v1566 = vadd.f32 %v1288, %v1519
        %v1567 = vadd.f32 %v1289, %v1522
        %v1568 = vadd.f32 %v1290, %v1525
        %v1569 = vadd.f32 %v1291, %v1528
        %v1570 = vadd.f32 %v1292, %v1531
        %v1571 = vadd.f32 %v1293, %v1534
        %v1572 = vadd.f32 %v1294, %v1537
        %v1573 = vadd.f32 %v1295, %v1540
        %v1574 = vld [vmem:[%s1017 + $0x2] sm:$0xff]
        %v1575 = vld [vmem:[%s1017 + $0xa] sm:$0xff]
        %v1576 = vld [vmem:[%s1017 + $0x1a] sm:$0xff]
        %v1577 = vld [vmem:[%s1017 + $0x22] sm:$0xff]
        %v1578 = vld [vmem:[%s1017 + $0x32] sm:$0xff]
        %v1579 = vld [vmem:[%s1017 + $0x3a] sm:$0xff]
        %v1580 = vld [vmem:[%s1017 + $0x4a] sm:$0xff]
        %v1581 = vld [vmem:[%s1017 + $0x52] sm:$0xff]
        %v1582 = vld [vmem:[%s1017 + $0x62] sm:$0xff]
        %v1583 = vld [vmem:[%s1017 + $0x6a] sm:$0xff]
        %v1584 = vld [vmem:[%s1017 + $0x7a] sm:$0xff]
        %v1585 = vld [vmem:[%s1017 + $0x82] sm:$0xff]
        %v1586 = vld [vmem:[%s1017 + $0x92] sm:$0xff]
        %v1587 = vld [vmem:[%s1017 + $0x9a] sm:$0xff]
        %v1588 = vld [vmem:[%s1017 + $0xaa] sm:$0xff]
        %v1589 = vld [vmem:[%s1017 + $0xb2] sm:$0xff]
        %v1590 = vld [vmem:[%s1017 + $0xc2] sm:$0xff]
        %v1591 = vld [vmem:[%s1017 + $0xca] sm:$0xff]
        %v1592 = vld [vmem:[%s1017 + $0xda] sm:$0xff]
        %v1593 = vld [vmem:[%s1017 + $0xe2] sm:$0xff]
        %v1594 = vld [vmem:[%s1017 + $0xf2] sm:$0xff]
        %v1595 = vld [vmem:[%s1017 + $0xfa] sm:$0xff]
        %v1596 = vld [vmem:[%s1017 + $0x10a] sm:$0xff]
        %v1597 = vld [vmem:[%s1017 + $0x112] sm:$0xff]
        %v1598 = vld [vmem:[%s1017 + $0x122] sm:$0xff]
        %v1599 = vld [vmem:[%s1017 + $0x12a] sm:$0xff]
        %v1600 = vld [vmem:[%s1017 + $0x13a] sm:$0xff]
        %v1601 = vld [vmem:[%s1017 + $0x142] sm:$0xff]
        %v1602 = vld [vmem:[%s1017 + $0x152] sm:$0xff]
        %v1603 = vld [vmem:[%s1017 + $0x15a] sm:$0xff]
        %v1604 = vld [vmem:[%s1017 + $0x16a] sm:$0xff]
        %v1605 = vld [vmem:[%s1017 + $0x172] sm:$0xff]
        %s1606 = scalar_lea.vmem %s1, 20
        %v1607 = vld [vmem:[%s1606] sm:$0xf]
        %v1609 = vsel %vm313, %v1574, 0
        %v1612 = vsel %vm313, %v1575, 0
        %v1615 = vsel %vm313, %v1576, 0
        %v1618 = vsel %vm313, %v1577, 0
        %v1621 = vsel %vm313, %v1578, 0
        %v1624 = vsel %vm313, %v1579, 0
        %v1627 = vsel %vm313, %v1580, 0
        %v1630 = vsel %vm313, %v1581, 0
        %v1633 = vsel %vm313, %v1582, 0
        %v1636 = vsel %vm313, %v1583, 0
        %v1639 = vsel %vm313, %v1584, 0
        %v1642 = vsel %vm313, %v1585, 0
        %v1645 = vsel %vm313, %v1586, 0
        %v1648 = vsel %vm313, %v1587, 0
        %v1651 = vsel %vm313, %v1588, 0
        %v1654 = vsel %vm313, %v1589, 0
        %v1657 = vsel %vm313, %v1590, 0
        %v1660 = vsel %vm313, %v1591, 0
        %v1663 = vsel %vm313, %v1592, 0
        %v1666 = vsel %vm313, %v1593, 0
        %v1669 = vsel %vm313, %v1594, 0
        %v1672 = vsel %vm313, %v1595, 0
        %v1675 = vsel %vm313, %v1596, 0
        %v1678 = vsel %vm313, %v1597, 0
        %v1681 = vsel %vm313, %v1598, 0
        %v1684 = vsel %vm313, %v1599, 0
        %v1687 = vsel %vm313, %v1600, 0
        %v1690 = vsel %vm313, %v1601, 0
        %v1693 = vsel %vm313, %v1602, 0
        %v1696 = vsel %vm313, %v1603, 0
        %v1699 = vsel %vm313, %v1604, 0
        %v1702 = vsel %vm313, %v1605, 0
        %v1705 = vsel %vm410, %v1607, 0
        %1707 = vmatpush.msra.mxu0 0.0
        %1708 = vmatpush.msra.mxu0 0.0
        %1709 = vmatpush.msra.mxu0 0.0
        %1710 = vmatpush.msra.mxu0 0.0
        %1711 = vmatpush.msra.mxu0 0.0
        %1712 = vmatpush.msra.mxu0 0.0
        %1713 = vmatpush.msra.mxu0 0.0
        %1714 = vmatpush.msra.mxu0 0.0
        %1715 = vmatpush.msra.mxu0 0.0
        %1716 = vmatpush.msra.mxu0 0.0
        %1717 = vmatpush.msra.mxu0 0.0
        %1718 = vmatpush.msra.mxu0 0.0
        %1719 = vmatpush.msra.mxu0 0.0
        %1720 = vmatpush.msra.mxu0 0.0
        %1721 = vmatpush.msra.mxu0 0.0
        %1722 = vmatpush.msra.mxu0 %v1705
        %1723 = vmatmul.f32.gmra.mxu0 %v1609
        %v1724 = vpop.f32.mrf.mxu0
        %v1725 = vadd.f32 0.0, %v1724
        %1726 = vmatmul.f32.gmra.mxu0 %v1612
        %v1727 = vpop.f32.mrf.mxu0
        %v1728 = vadd.f32 0.0, %v1727
        %1729 = vmatmul.f32.gmra.mxu0 %v1615
        %v1730 = vpop.f32.mrf.mxu0
        %v1731 = vadd.f32 0.0, %v1730
        %1732 = vmatmul.f32.gmra.mxu0 %v1618
        %v1733 = vpop.f32.mrf.mxu0
        %v1734 = vadd.f32 0.0, %v1733
        %1735 = vmatmul.f32.gmra.mxu0 %v1621
        %v1736 = vpop.f32.mrf.mxu0
        %v1737 = vadd.f32 0.0, %v1736
        %1738 = vmatmul.f32.gmra.mxu0 %v1624
        %v1739 = vpop.f32.mrf.mxu0
        %v1740 = vadd.f32 0.0, %v1739
        %1741 = vmatmul.f32.gmra.mxu0 %v1627
        %v1742 = vpop.f32.mrf.mxu0
        %v1743 = vadd.f32 0.0, %v1742
        %1744 = vmatmul.f32.gmra.mxu0 %v1630
        %v1745 = vpop.f32.mrf.mxu0
        %v1746 = vadd.f32 0.0, %v1745
        %1747 = vmatmul.f32.gmra.mxu0 %v1633
        %v1748 = vpop.f32.mrf.mxu0
        %v1749 = vadd.f32 0.0, %v1748
        %1750 = vmatmul.f32.gmra.mxu0 %v1636
        %v1751 = vpop.f32.mrf.mxu0
        %v1752 = vadd.f32 0.0, %v1751
        %1753 = vmatmul.f32.gmra.mxu0 %v1639
        %v1754 = vpop.f32.mrf.mxu0
        %v1755 = vadd.f32 0.0, %v1754
        %1756 = vmatmul.f32.gmra.mxu0 %v1642
        %v1757 = vpop.f32.mrf.mxu0
        %v1758 = vadd.f32 0.0, %v1757
        %1759 = vmatmul.f32.gmra.mxu0 %v1645
        %v1760 = vpop.f32.mrf.mxu0
        %v1761 = vadd.f32 0.0, %v1760
        %1762 = vmatmul.f32.gmra.mxu0 %v1648
        %v1763 = vpop.f32.mrf.mxu0
        %v1764 = vadd.f32 0.0, %v1763
        %1765 = vmatmul.f32.gmra.mxu0 %v1651
        %v1766 = vpop.f32.mrf.mxu0
        %v1767 = vadd.f32 0.0, %v1766
        %1768 = vmatmul.f32.gmra.mxu0 %v1654
        %v1769 = vpop.f32.mrf.mxu0
        %v1770 = vadd.f32 0.0, %v1769
        %1771 = vmatmul.f32.gmra.mxu0 %v1657
        %v1772 = vpop.f32.mrf.mxu0
        %v1773 = vadd.f32 0.0, %v1772
        %1774 = vmatmul.f32.gmra.mxu0 %v1660
        %v1775 = vpop.f32.mrf.mxu0
        %v1776 = vadd.f32 0.0, %v1775
        %1777 = vmatmul.f32.gmra.mxu0 %v1663
        %v1778 = vpop.f32.mrf.mxu0
        %v1779 = vadd.f32 0.0, %v1778
        %1780 = vmatmul.f32.gmra.mxu0 %v1666
        %v1781 = vpop.f32.mrf.mxu0
        %v1782 = vadd.f32 0.0, %v1781
        %1783 = vmatmul.f32.gmra.mxu0 %v1669
        %v1784 = vpop.f32.mrf.mxu0
        %v1785 = vadd.f32 0.0, %v1784
        %1786 = vmatmul.f32.gmra.mxu0 %v1672
        %v1787 = vpop.f32.mrf.mxu0
        %v1788 = vadd.f32 0.0, %v1787
        %1789 = vmatmul.f32.gmra.mxu0 %v1675
        %v1790 = vpop.f32.mrf.mxu0
        %v1791 = vadd.f32 0.0, %v1790
        %1792 = vmatmul.f32.gmra.mxu0 %v1678
        %v1793 = vpop.f32.mrf.mxu0
        %v1794 = vadd.f32 0.0, %v1793
        %1795 = vmatmul.f32.gmra.mxu0 %v1681
        %v1796 = vpop.f32.mrf.mxu0
        %v1797 = vadd.f32 0.0, %v1796
        %1798 = vmatmul.f32.gmra.mxu0 %v1684
        %v1799 = vpop.f32.mrf.mxu0
        %v1800 = vadd.f32 0.0, %v1799
        %1801 = vmatmul.f32.gmra.mxu0 %v1687
        %v1802 = vpop.f32.mrf.mxu0
        %v1803 = vadd.f32 0.0, %v1802
        %1804 = vmatmul.f32.gmra.mxu0 %v1690
        %v1805 = vpop.f32.mrf.mxu0
        %v1806 = vadd.f32 0.0, %v1805
        %1807 = vmatmul.f32.gmra.mxu0 %v1693
        %v1808 = vpop.f32.mrf.mxu0
        %v1809 = vadd.f32 0.0, %v1808
        %1810 = vmatmul.f32.gmra.mxu0 %v1696
        %v1811 = vpop.f32.mrf.mxu0
        %v1812 = vadd.f32 0.0, %v1811
        %1813 = vmatmul.f32.gmra.mxu0 %v1699
        %v1814 = vpop.f32.mrf.mxu0
        %v1815 = vadd.f32 0.0, %v1814
        %1816 = vmatmul.f32.gmra.mxu0 %v1702
        %v1817 = vpop.f32.mrf.mxu0
        %v1818 = vadd.f32 0.0, %v1817
        %1819 = vdwg.mxu0
        %v1820 = vadd.f32 %v1542, %v1725
        %v1821 = vadd.f32 %v1543, %v1728
        %v1822 = vadd.f32 %v1544, %v1731
        %v1823 = vadd.f32 %v1545, %v1734
        %v1824 = vadd.f32 %v1546, %v1737
        %v1825 = vadd.f32 %v1547, %v1740
        %v1826 = vadd.f32 %v1548, %v1743
        %v1827 = vadd.f32 %v1549, %v1746
        %v1828 = vadd.f32 %v1550, %v1749
        %v1829 = vadd.f32 %v1551, %v1752
        %v1830 = vadd.f32 %v1552, %v1755
        %v1831 = vadd.f32 %v1553, %v1758
        %v1832 = vadd.f32 %v1554, %v1761
        %v1833 = vadd.f32 %v1555, %v1764
        %v1834 = vadd.f32 %v1556, %v1767
        %v1835 = vadd.f32 %v1557, %v1770
        %v1836 = vadd.f32 %v1558, %v1773
        %v1837 = vadd.f32 %v1559, %v1776
        %v1838 = vadd.f32 %v1560, %v1779
        %v1839 = vadd.f32 %v1561, %v1782
        %v1840 = vadd.f32 %v1562, %v1785
        %v1841 = vadd.f32 %v1563, %v1788
        %v1842 = vadd.f32 %v1564, %v1791
        %v1843 = vadd.f32 %v1565, %v1794
        %v1844 = vadd.f32 %v1566, %v1797
        %v1845 = vadd.f32 %v1567, %v1800
        %v1846 = vadd.f32 %v1568, %v1803
        %v1847 = vadd.f32 %v1569, %v1806
        %v1848 = vadd.f32 %v1570, %v1809
        %v1849 = vadd.f32 %v1571, %v1812
        %v1850 = vadd.f32 %v1572, %v1815
        %v1851 = vadd.f32 %v1573, %v1818
        %s1852 = scalar_lea.vmem %s238, 48
        %v1853 = vld [vmem:[%s1852] sm:$0xff]
        %v1854 = vld [vmem:[%s1852 + $0x8] sm:$0xff]
        %v1855 = vld [vmem:[%s1852 + $0x18] sm:$0xff]
        %v1856 = vld [vmem:[%s1852 + $0x20] sm:$0xff]
        %v1857 = vld [vmem:[%s1852 + $0x30] sm:$0xff]
        %v1858 = vld [vmem:[%s1852 + $0x38] sm:$0xff]
        %v1859 = vld [vmem:[%s1852 + $0x48] sm:$0xff]
        %v1860 = vld [vmem:[%s1852 + $0x50] sm:$0xff]
        %v1861 = vld [vmem:[%s1852 + $0x60] sm:$0xff]
        %v1862 = vld [vmem:[%s1852 + $0x68] sm:$0xff]
        %v1863 = vld [vmem:[%s1852 + $0x78] sm:$0xff]
        %v1864 = vld [vmem:[%s1852 + $0x80] sm:$0xff]
        %v1865 = vld [vmem:[%s1852 + $0x90] sm:$0xff]
        %v1866 = vld [vmem:[%s1852 + $0x98] sm:$0xff]
        %v1867 = vld [vmem:[%s1852 + $0xa8] sm:$0xff]
        %v1868 = vld [vmem:[%s1852 + $0xb0] sm:$0xff]
        %v1869 = vld [vmem:[%s1852 + $0xc0] sm:$0xff]
        %v1870 = vld [vmem:[%s1852 + $0xc8] sm:$0xff]
        %v1871 = vld [vmem:[%s1852 + $0xd8] sm:$0xff]
        %v1872 = vld [vmem:[%s1852 + $0xe0] sm:$0xff]
        %v1873 = vld [vmem:[%s1852 + $0xf0] sm:$0xff]
        %v1874 = vld [vmem:[%s1852 + $0xf8] sm:$0xff]
        %v1875 = vld [vmem:[%s1852 + $0x108] sm:$0xff]
        %v1876 = vld [vmem:[%s1852 + $0x110] sm:$0xff]
        %v1877 = vld [vmem:[%s1852 + $0x120] sm:$0xff]
        %v1878 = vld [vmem:[%s1852 + $0x128] sm:$0xff]
        %v1879 = vld [vmem:[%s1852 + $0x138] sm:$0xff]
        %v1880 = vld [vmem:[%s1852 + $0x140] sm:$0xff]
        %v1881 = vld [vmem:[%s1852 + $0x150] sm:$0xff]
        %v1882 = vld [vmem:[%s1852 + $0x158] sm:$0xff]
        %v1883 = vld [vmem:[%s1852 + $0x168] sm:$0xff]
        %v1884 = vld [vmem:[%s1852 + $0x170] sm:$0xff]
        %s1885 = scalar_lea.vmem %s1, 24
        %v1886 = vld [vmem:[%s1885] sm:$0xf]
        %v1888 = vsel %vm313, %v1853, 0
        %v1891 = vsel %vm313, %v1854, 0
        %v1894 = vsel %vm313, %v1855, 0
        %v1897 = vsel %vm313, %v1856, 0
        %v1900 = vsel %vm313, %v1857, 0
        %v1903 = vsel %vm313, %v1858, 0
        %v1906 = vsel %vm313, %v1859, 0
        %v1909 = vsel %vm313, %v1860, 0
        %v1912 = vsel %vm313, %v1861, 0
        %v1915 = vsel %vm313, %v1862, 0
        %v1918 = vsel %vm313, %v1863, 0
        %v1921 = vsel %vm313, %v1864, 0
        %v1924 = vsel %vm313, %v1865, 0
        %v1927 = vsel %vm313, %v1866, 0
        %v1930 = vsel %vm313, %v1867, 0
        %v1933 = vsel %vm313, %v1868, 0
        %v1936 = vsel %vm313, %v1869, 0
        %v1939 = vsel %vm313, %v1870, 0
        %v1942 = vsel %vm313, %v1871, 0
        %v1945 = vsel %vm313, %v1872, 0
        %v1948 = vsel %vm313, %v1873, 0
        %v1951 = vsel %vm313, %v1874, 0
        %v1954 = vsel %vm313, %v1875, 0
        %v1957 = vsel %vm313, %v1876, 0
        %v1960 = vsel %vm313, %v1877, 0
        %v1963 = vsel %vm313, %v1878, 0
        %v1966 = vsel %vm313, %v1879, 0
        %v1969 = vsel %vm313, %v1880, 0
        %v1972 = vsel %vm313, %v1881, 0
        %v1975 = vsel %vm313, %v1882, 0
        %v1978 = vsel %vm313, %v1883, 0
        %v1981 = vsel %vm313, %v1884, 0
        %v1984 = vsel %vm410, %v1886, 0
        %1986 = vmatpush.msra.mxu0 0.0
        %1987 = vmatpush.msra.mxu0 0.0
        %1988 = vmatpush.msra.mxu0 0.0
        %1989 = vmatpush.msra.mxu0 0.0
        %1990 = vmatpush.msra.mxu0 0.0
        %1991 = vmatpush.msra.mxu0 0.0
        %1992 = vmatpush.msra.mxu0 0.0
        %1993 = vmatpush.msra.mxu0 0.0
        %1994 = vmatpush.msra.mxu0 0.0
        %1995 = vmatpush.msra.mxu0 0.0
        %1996 = vmatpush.msra.mxu0 0.0
        %1997 = vmatpush.msra.mxu0 0.0
        %1998 = vmatpush.msra.mxu0 0.0
        %1999 = vmatpush.msra.mxu0 0.0
        %2000 = vmatpush.msra.mxu0 0.0
        %2001 = vmatpush.msra.mxu0 %v1984
        %2002 = vmatmul.f32.gmra.mxu0 %v1888
        %v2003 = vpop.f32.mrf.mxu0
        %v2004 = vadd.f32 0.0, %v2003
        %2005 = vmatmul.f32.gmra.mxu0 %v1891
        %v2006 = vpop.f32.mrf.mxu0
        %v2007 = vadd.f32 0.0, %v2006
        %2008 = vmatmul.f32.gmra.mxu0 %v1894
        %v2009 = vpop.f32.mrf.mxu0
        %v2010 = vadd.f32 0.0, %v2009
        %2011 = vmatmul.f32.gmra.mxu0 %v1897
        %v2012 = vpop.f32.mrf.mxu0
        %v2013 = vadd.f32 0.0, %v2012
        %2014 = vmatmul.f32.gmra.mxu0 %v1900
        %v2015 = vpop.f32.mrf.mxu0
        %v2016 = vadd.f32 0.0, %v2015
        %2017 = vmatmul.f32.gmra.mxu0 %v1903
        %v2018 = vpop.f32.mrf.mxu0
        %v2019 = vadd.f32 0.0, %v2018
        %2020 = vmatmul.f32.gmra.mxu0 %v1906
        %v2021 = vpop.f32.mrf.mxu0
        %v2022 = vadd.f32 0.0, %v2021
        %2023 = vmatmul.f32.gmra.mxu0 %v1909
        %v2024 = vpop.f32.mrf.mxu0
        %v2025 = vadd.f32 0.0, %v2024
        %2026 = vmatmul.f32.gmra.mxu0 %v1912
        %v2027 = vpop.f32.mrf.mxu0
        %v2028 = vadd.f32 0.0, %v2027
        %2029 = vmatmul.f32.gmra.mxu0 %v1915
        %v2030 = vpop.f32.mrf.mxu0
        %v2031 = vadd.f32 0.0, %v2030
        %2032 = vmatmul.f32.gmra.mxu0 %v1918
        %v2033 = vpop.f32.mrf.mxu0
        %v2034 = vadd.f32 0.0, %v2033
        %2035 = vmatmul.f32.gmra.mxu0 %v1921
        %v2036 = vpop.f32.mrf.mxu0
        %v2037 = vadd.f32 0.0, %v2036
        %2038 = vmatmul.f32.gmra.mxu0 %v1924
        %v2039 = vpop.f32.mrf.mxu0
        %v2040 = vadd.f32 0.0, %v2039
        %2041 = vmatmul.f32.gmra.mxu0 %v1927
        %v2042 = vpop.f32.mrf.mxu0
        %v2043 = vadd.f32 0.0, %v2042
        %2044 = vmatmul.f32.gmra.mxu0 %v1930
        %v2045 = vpop.f32.mrf.mxu0
        %v2046 = vadd.f32 0.0, %v2045
        %2047 = vmatmul.f32.gmra.mxu0 %v1933
        %v2048 = vpop.f32.mrf.mxu0
        %v2049 = vadd.f32 0.0, %v2048
        %2050 = vmatmul.f32.gmra.mxu0 %v1936
        %v2051 = vpop.f32.mrf.mxu0
        %v2052 = vadd.f32 0.0, %v2051
        %2053 = vmatmul.f32.gmra.mxu0 %v1939
        %v2054 = vpop.f32.mrf.mxu0
        %v2055 = vadd.f32 0.0, %v2054
        %2056 = vmatmul.f32.gmra.mxu0 %v1942
        %v2057 = vpop.f32.mrf.mxu0
        %v2058 = vadd.f32 0.0, %v2057
        %2059 = vmatmul.f32.gmra.mxu0 %v1945
        %v2060 = vpop.f32.mrf.mxu0
        %v2061 = vadd.f32 0.0, %v2060
        %2062 = vmatmul.f32.gmra.mxu0 %v1948
        %v2063 = vpop.f32.mrf.mxu0
        %v2064 = vadd.f32 0.0, %v2063
        %2065 = vmatmul.f32.gmra.mxu0 %v1951
        %v2066 = vpop.f32.mrf.mxu0
        %v2067 = vadd.f32 0.0, %v2066
        %2068 = vmatmul.f32.gmra.mxu0 %v1954
        %v2069 = vpop.f32.mrf.mxu0
        %v2070 = vadd.f32 0.0, %v2069
        %2071 = vmatmul.f32.gmra.mxu0 %v1957
        %v2072 = vpop.f32.mrf.mxu0
        %v2073 = vadd.f32 0.0, %v2072
        %2074 = vmatmul.f32.gmra.mxu0 %v1960
        %v2075 = vpop.f32.mrf.mxu0
        %v2076 = vadd.f32 0.0, %v2075
        %2077 = vmatmul.f32.gmra.mxu0 %v1963
        %v2078 = vpop.f32.mrf.mxu0
        %v2079 = vadd.f32 0.0, %v2078
        %2080 = vmatmul.f32.gmra.mxu0 %v1966
        %v2081 = vpop.f32.mrf.mxu0
        %v2082 = vadd.f32 0.0, %v2081
        %2083 = vmatmul.f32.gmra.mxu0 %v1969
        %v2084 = vpop.f32.mrf.mxu0
        %v2085 = vadd.f32 0.0, %v2084
        %2086 = vmatmul.f32.gmra.mxu0 %v1972
        %v2087 = vpop.f32.mrf.mxu0
        %v2088 = vadd.f32 0.0, %v2087
        %2089 = vmatmul.f32.gmra.mxu0 %v1975
        %v2090 = vpop.f32.mrf.mxu0
        %v2091 = vadd.f32 0.0, %v2090
        %2092 = vmatmul.f32.gmra.mxu0 %v1978
        %v2093 = vpop.f32.mrf.mxu0
        %v2094 = vadd.f32 0.0, %v2093
        %2095 = vmatmul.f32.gmra.mxu0 %v1981
        %v2096 = vpop.f32.mrf.mxu0
        %v2097 = vadd.f32 0.0, %v2096
        %2098 = vdwg.mxu0
        %v2099 = vadd.f32 %v1820, %v2004
        %v2100 = vadd.f32 %v1821, %v2007
        %v2101 = vadd.f32 %v1822, %v2010
        %v2102 = vadd.f32 %v1823, %v2013
        %v2103 = vadd.f32 %v1824, %v2016
        %v2104 = vadd.f32 %v1825, %v2019
        %v2105 = vadd.f32 %v1826, %v2022
        %v2106 = vadd.f32 %v1827, %v2025
        %v2107 = vadd.f32 %v1828, %v2028
        %v2108 = vadd.f32 %v1829, %v2031
        %v2109 = vadd.f32 %v1830, %v2034
        %v2110 = vadd.f32 %v1831, %v2037
        %v2111 = vadd.f32 %v1832, %v2040
        %v2112 = vadd.f32 %v1833, %v2043
        %v2113 = vadd.f32 %v1834, %v2046
        %v2114 = vadd.f32 %v1835, %v2049
        %v2115 = vadd.f32 %v1836, %v2052
        %v2116 = vadd.f32 %v1837, %v2055
        %v2117 = vadd.f32 %v1838, %v2058
        %v2118 = vadd.f32 %v1839, %v2061
        %v2119 = vadd.f32 %v1840, %v2064
        %v2120 = vadd.f32 %v1841, %v2067
        %v2121 = vadd.f32 %v1842, %v2070
        %v2122 = vadd.f32 %v1843, %v2073
        %v2123 = vadd.f32 %v1844, %v2076
        %v2124 = vadd.f32 %v1845, %v2079
        %v2125 = vadd.f32 %v1846, %v2082
        %v2126 = vadd.f32 %v1847, %v2085
        %v2127 = vadd.f32 %v1848, %v2088
        %v2128 = vadd.f32 %v1849, %v2091
        %v2129 = vadd.f32 %v1850, %v2094
        %v2130 = vadd.f32 %v1851, %v2097
        %v2131 = vld [vmem:[%s1852 + $0x1] sm:$0xff]
        %v2132 = vld [vmem:[%s1852 + $0x9] sm:$0xff]
        %v2133 = vld [vmem:[%s1852 + $0x19] sm:$0xff]
        %v2134 = vld [vmem:[%s1852 + $0x21] sm:$0xff]
        %v2135 = vld [vmem:[%s1852 + $0x31] sm:$0xff]
        %v2136 = vld [vmem:[%s1852 + $0x39] sm:$0xff]
        %v2137 = vld [vmem:[%s1852 + $0x49] sm:$0xff]
        %v2138 = vld [vmem:[%s1852 + $0x51] sm:$0xff]
        %v2139 = vld [vmem:[%s1852 + $0x61] sm:$0xff]
        %v2140 = vld [vmem:[%s1852 + $0x69] sm:$0xff]
        %v2141 = vld [vmem:[%s1852 + $0x79] sm:$0xff]
        %v2142 = vld [vmem:[%s1852 + $0x81] sm:$0xff]
        %v2143 = vld [vmem:[%s1852 + $0x91] sm:$0xff]
        %v2144 = vld [vmem:[%s1852 + $0x99] sm:$0xff]
        %v2145 = vld [vmem:[%s1852 + $0xa9] sm:$0xff]
        %v2146 = vld [vmem:[%s1852 + $0xb1] sm:$0xff]
        %v2147 = vld [vmem:[%s1852 + $0xc1] sm:$0xff]
        %v2148 = vld [vmem:[%s1852 + $0xc9] sm:$0xff]
        %v2149 = vld [vmem:[%s1852 + $0xd9] sm:$0xff]
        %v2150 = vld [vmem:[%s1852 + $0xe1] sm:$0xff]
        %v2151 = vld [vmem:[%s1852 + $0xf1] sm:$0xff]
        %v2152 = vld [vmem:[%s1852 + $0xf9] sm:$0xff]
        %v2153 = vld [vmem:[%s1852 + $0x109] sm:$0xff]
        %v2154 = vld [vmem:[%s1852 + $0x111] sm:$0xff]
        %v2155 = vld [vmem:[%s1852 + $0x121] sm:$0xff]
        %v2156 = vld [vmem:[%s1852 + $0x129] sm:$0xff]
        %v2157 = vld [vmem:[%s1852 + $0x139] sm:$0xff]
        %v2158 = vld [vmem:[%s1852 + $0x141] sm:$0xff]
        %v2159 = vld [vmem:[%s1852 + $0x151] sm:$0xff]
        %v2160 = vld [vmem:[%s1852 + $0x159] sm:$0xff]
        %v2161 = vld [vmem:[%s1852 + $0x169] sm:$0xff]
        %v2162 = vld [vmem:[%s1852 + $0x171] sm:$0xff]
        %s2163 = scalar_lea.vmem %s1, 28
        %v2164 = vld [vmem:[%s2163] sm:$0xf]
        %v2166 = vsel %vm313, %v2131, 0
        %v2169 = vsel %vm313, %v2132, 0
        %v2172 = vsel %vm313, %v2133, 0
        %v2175 = vsel %vm313, %v2134, 0
        %v2178 = vsel %vm313, %v2135, 0
        %v2181 = vsel %vm313, %v2136, 0
        %v2184 = vsel %vm313, %v2137, 0
        %v2187 = vsel %vm313, %v2138, 0
        %v2190 = vsel %vm313, %v2139, 0
        %v2193 = vsel %vm313, %v2140, 0
        %v2196 = vsel %vm313, %v2141, 0
        %v2199 = vsel %vm313, %v2142, 0
        %v2202 = vsel %vm313, %v2143, 0
        %v2205 = vsel %vm313, %v2144, 0
        %v2208 = vsel %vm313, %v2145, 0
        %v2211 = vsel %vm313, %v2146, 0
        %v2214 = vsel %vm313, %v2147, 0
        %v2217 = vsel %vm313, %v2148, 0
        %v2220 = vsel %vm313, %v2149, 0
        %v2223 = vsel %vm313, %v2150, 0
        %v2226 = vsel %vm313, %v2151, 0
        %v2229 = vsel %vm313, %v2152, 0
        %v2232 = vsel %vm313, %v2153, 0
        %v2235 = vsel %vm313, %v2154, 0
        %v2238 = vsel %vm313, %v2155, 0
        %v2241 = vsel %vm313, %v2156, 0
        %v2244 = vsel %vm313, %v2157, 0
        %v2247 = vsel %vm313, %v2158, 0
        %v2250 = vsel %vm313, %v2159, 0
        %v2253 = vsel %vm313, %v2160, 0
        %v2256 = vsel %vm313, %v2161, 0
        %v2259 = vsel %vm313, %v2162, 0
        %v2262 = vsel %vm410, %v2164, 0
        %2264 = vmatpush.msra.mxu0 0.0
        %2265 = vmatpush.msra.mxu0 0.0
        %2266 = vmatpush.msra.mxu0 0.0
        %2267 = vmatpush.msra.mxu0 0.0
        %2268 = vmatpush.msra.mxu0 0.0
        %2269 = vmatpush.msra.mxu0 0.0
        %2270 = vmatpush.msra.mxu0 0.0
        %2271 = vmatpush.msra.mxu0 0.0
        %2272 = vmatpush.msra.mxu0 0.0
        %2273 = vmatpush.msra.mxu0 0.0
        %2274 = vmatpush.msra.mxu0 0.0
        %2275 = vmatpush.msra.mxu0 0.0
        %2276 = vmatpush.msra.mxu0 0.0
        %2277 = vmatpush.msra.mxu0 0.0
        %2278 = vmatpush.msra.mxu0 0.0
        %2279 = vmatpush.msra.mxu0 %v2262
        %2280 = vmatmul.f32.gmra.mxu0 %v2166
        %v2281 = vpop.f32.mrf.mxu0
        %v2282 = vadd.f32 0.0, %v2281
        %2283 = vmatmul.f32.gmra.mxu0 %v2169
        %v2284 = vpop.f32.mrf.mxu0
        %v2285 = vadd.f32 0.0, %v2284
        %2286 = vmatmul.f32.gmra.mxu0 %v2172
        %v2287 = vpop.f32.mrf.mxu0
        %v2288 = vadd.f32 0.0, %v2287
        %2289 = vmatmul.f32.gmra.mxu0 %v2175
        %v2290 = vpop.f32.mrf.mxu0
        %v2291 = vadd.f32 0.0, %v2290
        %2292 = vmatmul.f32.gmra.mxu0 %v2178
        %v2293 = vpop.f32.mrf.mxu0
        %v2294 = vadd.f32 0.0, %v2293
        %2295 = vmatmul.f32.gmra.mxu0 %v2181
        %v2296 = vpop.f32.mrf.mxu0
        %v2297 = vadd.f32 0.0, %v2296
        %2298 = vmatmul.f32.gmra.mxu0 %v2184
        %v2299 = vpop.f32.mrf.mxu0
        %v2300 = vadd.f32 0.0, %v2299
        %2301 = vmatmul.f32.gmra.mxu0 %v2187
        %v2302 = vpop.f32.mrf.mxu0
        %v2303 = vadd.f32 0.0, %v2302
        %2304 = vmatmul.f32.gmra.mxu0 %v2190
        %v2305 = vpop.f32.mrf.mxu0
        %v2306 = vadd.f32 0.0, %v2305
        %2307 = vmatmul.f32.gmra.mxu0 %v2193
        %v2308 = vpop.f32.mrf.mxu0
        %v2309 = vadd.f32 0.0, %v2308
        %2310 = vmatmul.f32.gmra.mxu0 %v2196
        %v2311 = vpop.f32.mrf.mxu0
        %v2312 = vadd.f32 0.0, %v2311
        %2313 = vmatmul.f32.gmra.mxu0 %v2199
        %v2314 = vpop.f32.mrf.mxu0
        %v2315 = vadd.f32 0.0, %v2314
        %2316 = vmatmul.f32.gmra.mxu0 %v2202
        %v2317 = vpop.f32.mrf.mxu0
        %v2318 = vadd.f32 0.0, %v2317
        %2319 = vmatmul.f32.gmra.mxu0 %v2205
        %v2320 = vpop.f32.mrf.mxu0
        %v2321 = vadd.f32 0.0, %v2320
        %2322 = vmatmul.f32.gmra.mxu0 %v2208
        %v2323 = vpop.f32.mrf.mxu0
        %v2324 = vadd.f32 0.0, %v2323
        %2325 = vmatmul.f32.gmra.mxu0 %v2211
        %v2326 = vpop.f32.mrf.mxu0
        %v2327 = vadd.f32 0.0, %v2326
        %2328 = vmatmul.f32.gmra.mxu0 %v2214
        %v2329 = vpop.f32.mrf.mxu0
        %v2330 = vadd.f32 0.0, %v2329
        %2331 = vmatmul.f32.gmra.mxu0 %v2217
        %v2332 = vpop.f32.mrf.mxu0
        %v2333 = vadd.f32 0.0, %v2332
        %2334 = vmatmul.f32.gmra.mxu0 %v2220
        %v2335 = vpop.f32.mrf.mxu0
        %v2336 = vadd.f32 0.0, %v2335
        %2337 = vmatmul.f32.gmra.mxu0 %v2223
        %v2338 = vpop.f32.mrf.mxu0
        %v2339 = vadd.f32 0.0, %v2338
        %2340 = vmatmul.f32.gmra.mxu0 %v2226
        %v2341 = vpop.f32.mrf.mxu0
        %v2342 = vadd.f32 0.0, %v2341
        %2343 = vmatmul.f32.gmra.mxu0 %v2229
        %v2344 = vpop.f32.mrf.mxu0
        %v2345 = vadd.f32 0.0, %v2344
        %2346 = vmatmul.f32.gmra.mxu0 %v2232
        %v2347 = vpop.f32.mrf.mxu0
        %v2348 = vadd.f32 0.0, %v2347
        %2349 = vmatmul.f32.gmra.mxu0 %v2235
        %v2350 = vpop.f32.mrf.mxu0
        %v2351 = vadd.f32 0.0, %v2350
        %2352 = vmatmul.f32.gmra.mxu0 %v2238
        %v2353 = vpop.f32.mrf.mxu0
        %v2354 = vadd.f32 0.0, %v2353
        %2355 = vmatmul.f32.gmra.mxu0 %v2241
        %v2356 = vpop.f32.mrf.mxu0
        %v2357 = vadd.f32 0.0, %v2356
        %2358 = vmatmul.f32.gmra.mxu0 %v2244
        %v2359 = vpop.f32.mrf.mxu0
        %v2360 = vadd.f32 0.0, %v2359
        %2361 = vmatmul.f32.gmra.mxu0 %v2247
        %v2362 = vpop.f32.mrf.mxu0
        %v2363 = vadd.f32 0.0, %v2362
        %2364 = vmatmul.f32.gmra.mxu0 %v2250
        %v2365 = vpop.f32.mrf.mxu0
        %v2366 = vadd.f32 0.0, %v2365
        %2367 = vmatmul.f32.gmra.mxu0 %v2253
        %v2368 = vpop.f32.mrf.mxu0
        %v2369 = vadd.f32 0.0, %v2368
        %2370 = vmatmul.f32.gmra.mxu0 %v2256
        %v2371 = vpop.f32.mrf.mxu0
        %v2372 = vadd.f32 0.0, %v2371
        %2373 = vmatmul.f32.gmra.mxu0 %v2259
        %v2374 = vpop.f32.mrf.mxu0
        %v2375 = vadd.f32 0.0, %v2374
        %2376 = vdwg.mxu0
        %v2377 = vadd.f32 %v2099, %v2282
        %v2378 = vadd.f32 %v2100, %v2285
        %v2379 = vadd.f32 %v2101, %v2288
        %v2380 = vadd.f32 %v2102, %v2291
        %v2381 = vadd.f32 %v2103, %v2294
        %v2382 = vadd.f32 %v2104, %v2297
        %v2383 = vadd.f32 %v2105, %v2300
        %v2384 = vadd.f32 %v2106, %v2303
        %v2385 = vadd.f32 %v2107, %v2306
        %v2386 = vadd.f32 %v2108, %v2309
        %v2387 = vadd.f32 %v2109, %v2312
        %v2388 = vadd.f32 %v2110, %v2315
        %v2389 = vadd.f32 %v2111, %v2318
        %v2390 = vadd.f32 %v2112, %v2321
        %v2391 = vadd.f32 %v2113, %v2324
        %v2392 = vadd.f32 %v2114, %v2327
        %v2393 = vadd.f32 %v2115, %v2330
        %v2394 = vadd.f32 %v2116, %v2333
        %v2395 = vadd.f32 %v2117, %v2336
        %v2396 = vadd.f32 %v2118, %v2339
        %v2397 = vadd.f32 %v2119, %v2342
        %v2398 = vadd.f32 %v2120, %v2345
        %v2399 = vadd.f32 %v2121, %v2348
        %v2400 = vadd.f32 %v2122, %v2351
        %v2401 = vadd.f32 %v2123, %v2354
        %v2402 = vadd.f32 %v2124, %v2357
        %v2403 = vadd.f32 %v2125, %v2360
        %v2404 = vadd.f32 %v2126, %v2363
        %v2405 = vadd.f32 %v2127, %v2366
        %v2406 = vadd.f32 %v2128, %v2369
        %v2407 = vadd.f32 %v2129, %v2372
        %v2408 = vadd.f32 %v2130, %v2375
        %v2409 = vld [vmem:[%s1852 + $0x2] sm:$0xff]
        %v2410 = vld [vmem:[%s1852 + $0xa] sm:$0xff]
        %v2411 = vld [vmem:[%s1852 + $0x1a] sm:$0xff]
        %v2412 = vld [vmem:[%s1852 + $0x22] sm:$0xff]
        %v2413 = vld [vmem:[%s1852 + $0x32] sm:$0xff]
        %v2414 = vld [vmem:[%s1852 + $0x3a] sm:$0xff]
        %v2415 = vld [vmem:[%s1852 + $0x4a] sm:$0xff]
        %v2416 = vld [vmem:[%s1852 + $0x52] sm:$0xff]
        %v2417 = vld [vmem:[%s1852 + $0x62] sm:$0xff]
        %v2418 = vld [vmem:[%s1852 + $0x6a] sm:$0xff]
        %v2419 = vld [vmem:[%s1852 + $0x7a] sm:$0xff]
        %v2420 = vld [vmem:[%s1852 + $0x82] sm:$0xff]
        %v2421 = vld [vmem:[%s1852 + $0x92] sm:$0xff]
        %v2422 = vld [vmem:[%s1852 + $0x9a] sm:$0xff]
        %v2423 = vld [vmem:[%s1852 + $0xaa] sm:$0xff]
        %v2424 = vld [vmem:[%s1852 + $0xb2] sm:$0xff]
        %v2425 = vld [vmem:[%s1852 + $0xc2] sm:$0xff]
        %v2426 = vld [vmem:[%s1852 + $0xca] sm:$0xff]
        %v2427 = vld [vmem:[%s1852 + $0xda] sm:$0xff]
        %v2428 = vld [vmem:[%s1852 + $0xe2] sm:$0xff]
        %v2429 = vld [vmem:[%s1852 + $0xf2] sm:$0xff]
        %v2430 = vld [vmem:[%s1852 + $0xfa] sm:$0xff]
        %v2431 = vld [vmem:[%s1852 + $0x10a] sm:$0xff]
        %v2432 = vld [vmem:[%s1852 + $0x112] sm:$0xff]
        %v2433 = vld [vmem:[%s1852 + $0x122] sm:$0xff]
        %v2434 = vld [vmem:[%s1852 + $0x12a] sm:$0xff]
        %v2435 = vld [vmem:[%s1852 + $0x13a] sm:$0xff]
        %v2436 = vld [vmem:[%s1852 + $0x142] sm:$0xff]
        %v2437 = vld [vmem:[%s1852 + $0x152] sm:$0xff]
        %v2438 = vld [vmem:[%s1852 + $0x15a] sm:$0xff]
        %v2439 = vld [vmem:[%s1852 + $0x16a] sm:$0xff]
        %v2440 = vld [vmem:[%s1852 + $0x172] sm:$0xff]
        %s2441 = scalar_lea.vmem %s1, 32
        %v2442 = vld [vmem:[%s2441] sm:$0xf]
        %v2444 = vsel %vm313, %v2409, 0
        %v2447 = vsel %vm313, %v2410, 0
        %v2450 = vsel %vm313, %v2411, 0
        %v2453 = vsel %vm313, %v2412, 0
        %v2456 = vsel %vm313, %v2413, 0
        %v2459 = vsel %vm313, %v2414, 0
        %v2462 = vsel %vm313, %v2415, 0
        %v2465 = vsel %vm313, %v2416, 0
        %v2468 = vsel %vm313, %v2417, 0
        %v2471 = vsel %vm313, %v2418, 0
        %v2474 = vsel %vm313, %v2419, 0
        %v2477 = vsel %vm313, %v2420, 0
        %v2480 = vsel %vm313, %v2421, 0
        %v2483 = vsel %vm313, %v2422, 0
        %v2486 = vsel %vm313, %v2423, 0
        %v2489 = vsel %vm313, %v2424, 0
        %v2492 = vsel %vm313, %v2425, 0
        %v2495 = vsel %vm313, %v2426, 0
        %v2498 = vsel %vm313, %v2427, 0
        %v2501 = vsel %vm313, %v2428, 0
        %v2504 = vsel %vm313, %v2429, 0
        %v2507 = vsel %vm313, %v2430, 0
        %v2510 = vsel %vm313, %v2431, 0
        %v2513 = vsel %vm313, %v2432, 0
        %v2516 = vsel %vm313, %v2433, 0
        %v2519 = vsel %vm313, %v2434, 0
        %v2522 = vsel %vm313, %v2435, 0
        %v2525 = vsel %vm313, %v2436, 0
        %v2528 = vsel %vm313, %v2437, 0
        %v2531 = vsel %vm313, %v2438, 0
        %v2534 = vsel %vm313, %v2439, 0
        %v2537 = vsel %vm313, %v2440, 0
        %v2540 = vsel %vm410, %v2442, 0
        %2542 = vmatpush.msra.mxu0 0.0
        %2543 = vmatpush.msra.mxu0 0.0
        %2544 = vmatpush.msra.mxu0 0.0
        %2545 = vmatpush.msra.mxu0 0.0
        %2546 = vmatpush.msra.mxu0 0.0
        %2547 = vmatpush.msra.mxu0 0.0
        %2548 = vmatpush.msra.mxu0 0.0
        %2549 = vmatpush.msra.mxu0 0.0
        %2550 = vmatpush.msra.mxu0 0.0
        %2551 = vmatpush.msra.mxu0 0.0
        %2552 = vmatpush.msra.mxu0 0.0
        %2553 = vmatpush.msra.mxu0 0.0
        %2554 = vmatpush.msra.mxu0 0.0
        %2555 = vmatpush.msra.mxu0 0.0
        %2556 = vmatpush.msra.mxu0 0.0
        %2557 = vmatpush.msra.mxu0 %v2540
        %2558 = vmatmul.f32.gmra.mxu0 %v2444
        %v2559 = vpop.f32.mrf.mxu0
        %v2560 = vadd.f32 0.0, %v2559
        %2561 = vmatmul.f32.gmra.mxu0 %v2447
        %v2562 = vpop.f32.mrf.mxu0
        %v2563 = vadd.f32 0.0, %v2562
        %2564 = vmatmul.f32.gmra.mxu0 %v2450
        %v2565 = vpop.f32.mrf.mxu0
        %v2566 = vadd.f32 0.0, %v2565
        %2567 = vmatmul.f32.gmra.mxu0 %v2453
        %v2568 = vpop.f32.mrf.mxu0
        %v2569 = vadd.f32 0.0, %v2568
        %2570 = vmatmul.f32.gmra.mxu0 %v2456
        %v2571 = vpop.f32.mrf.mxu0
        %v2572 = vadd.f32 0.0, %v2571
        %2573 = vmatmul.f32.gmra.mxu0 %v2459
        %v2574 = vpop.f32.mrf.mxu0
        %v2575 = vadd.f32 0.0, %v2574
        %2576 = vmatmul.f32.gmra.mxu0 %v2462
        %v2577 = vpop.f32.mrf.mxu0
        %v2578 = vadd.f32 0.0, %v2577
        %2579 = vmatmul.f32.gmra.mxu0 %v2465
        %v2580 = vpop.f32.mrf.mxu0
        %v2581 = vadd.f32 0.0, %v2580
        %2582 = vmatmul.f32.gmra.mxu0 %v2468
        %v2583 = vpop.f32.mrf.mxu0
        %v2584 = vadd.f32 0.0, %v2583
        %2585 = vmatmul.f32.gmra.mxu0 %v2471
        %v2586 = vpop.f32.mrf.mxu0
        %v2587 = vadd.f32 0.0, %v2586
        %2588 = vmatmul.f32.gmra.mxu0 %v2474
        %v2589 = vpop.f32.mrf.mxu0
        %v2590 = vadd.f32 0.0, %v2589
        %2591 = vmatmul.f32.gmra.mxu0 %v2477
        %v2592 = vpop.f32.mrf.mxu0
        %v2593 = vadd.f32 0.0, %v2592
        %2594 = vmatmul.f32.gmra.mxu0 %v2480
        %v2595 = vpop.f32.mrf.mxu0
        %v2596 = vadd.f32 0.0, %v2595
        %2597 = vmatmul.f32.gmra.mxu0 %v2483
        %v2598 = vpop.f32.mrf.mxu0
        %v2599 = vadd.f32 0.0, %v2598
        %2600 = vmatmul.f32.gmra.mxu0 %v2486
        %v2601 = vpop.f32.mrf.mxu0
        %v2602 = vadd.f32 0.0, %v2601
        %2603 = vmatmul.f32.gmra.mxu0 %v2489
        %v2604 = vpop.f32.mrf.mxu0
        %v2605 = vadd.f32 0.0, %v2604
        %2606 = vmatmul.f32.gmra.mxu0 %v2492
        %v2607 = vpop.f32.mrf.mxu0
        %v2608 = vadd.f32 0.0, %v2607
        %2609 = vmatmul.f32.gmra.mxu0 %v2495
        %v2610 = vpop.f32.mrf.mxu0
        %v2611 = vadd.f32 0.0, %v2610
        %2612 = vmatmul.f32.gmra.mxu0 %v2498
        %v2613 = vpop.f32.mrf.mxu0
        %v2614 = vadd.f32 0.0, %v2613
        %2615 = vmatmul.f32.gmra.mxu0 %v2501
        %v2616 = vpop.f32.mrf.mxu0
        %v2617 = vadd.f32 0.0, %v2616
        %2618 = vmatmul.f32.gmra.mxu0 %v2504
        %v2619 = vpop.f32.mrf.mxu0
        %v2620 = vadd.f32 0.0, %v2619
        %2621 = vmatmul.f32.gmra.mxu0 %v2507
        %v2622 = vpop.f32.mrf.mxu0
        %v2623 = vadd.f32 0.0, %v2622
        %2624 = vmatmul.f32.gmra.mxu0 %v2510
        %v2625 = vpop.f32.mrf.mxu0
        %v2626 = vadd.f32 0.0, %v2625
        %2627 = vmatmul.f32.gmra.mxu0 %v2513
        %v2628 = vpop.f32.mrf.mxu0
        %v2629 = vadd.f32 0.0, %v2628
        %2630 = vmatmul.f32.gmra.mxu0 %v2516
        %v2631 = vpop.f32.mrf.mxu0
        %v2632 = vadd.f32 0.0, %v2631
        %2633 = vmatmul.f32.gmra.mxu0 %v2519
        %v2634 = vpop.f32.mrf.mxu0
        %v2635 = vadd.f32 0.0, %v2634
        %2636 = vmatmul.f32.gmra.mxu0 %v2522
        %v2637 = vpop.f32.mrf.mxu0
        %v2638 = vadd.f32 0.0, %v2637
        %2639 = vmatmul.f32.gmra.mxu0 %v2525
        %v2640 = vpop.f32.mrf.mxu0
        %v2641 = vadd.f32 0.0, %v2640
        %2642 = vmatmul.f32.gmra.mxu0 %v2528
        %v2643 = vpop.f32.mrf.mxu0
        %v2644 = vadd.f32 0.0, %v2643
        %2645 = vmatmul.f32.gmra.mxu0 %v2531
        %v2646 = vpop.f32.mrf.mxu0
        %v2647 = vadd.f32 0.0, %v2646
        %2648 = vmatmul.f32.gmra.mxu0 %v2534
        %v2649 = vpop.f32.mrf.mxu0
        %v2650 = vadd.f32 0.0, %v2649
        %2651 = vmatmul.f32.gmra.mxu0 %v2537
        %v2652 = vpop.f32.mrf.mxu0
        %v2653 = vadd.f32 0.0, %v2652
        %2654 = vdwg.mxu0
        %v2655 = vadd.f32 %v2377, %v2560
        %v2656 = vadd.f32 %v2378, %v2563
        %v2657 = vadd.f32 %v2379, %v2566
        %v2658 = vadd.f32 %v2380, %v2569
        %v2659 = vadd.f32 %v2381, %v2572
        %v2660 = vadd.f32 %v2382, %v2575
        %v2661 = vadd.f32 %v2383, %v2578
        %v2662 = vadd.f32 %v2384, %v2581
        %v2663 = vadd.f32 %v2385, %v2584
        %v2664 = vadd.f32 %v2386, %v2587
        %v2665 = vadd.f32 %v2387, %v2590
        %v2666 = vadd.f32 %v2388, %v2593
        %v2667 = vadd.f32 %v2389, %v2596
        %v2668 = vadd.f32 %v2390, %v2599
        %v2669 = vadd.f32 %v2391, %v2602
        %v2670 = vadd.f32 %v2392, %v2605
        %v2671 = vadd.f32 %v2393, %v2608
        %v2672 = vadd.f32 %v2394, %v2611
        %v2673 = vadd.f32 %v2395, %v2614
        %v2674 = vadd.f32 %v2396, %v2617
        %v2675 = vadd.f32 %v2397, %v2620
        %v2676 = vadd.f32 %v2398, %v2623
        %v2677 = vadd.f32 %v2399, %v2626
        %v2678 = vadd.f32 %v2400, %v2629
        %v2679 = vadd.f32 %v2401, %v2632
        %v2680 = vadd.f32 %v2402, %v2635
        %v2681 = vadd.f32 %v2403, %v2638
        %v2682 = vadd.f32 %v2404, %v2641
        %v2683 = vadd.f32 %v2405, %v2644
        %v2684 = vadd.f32 %v2406, %v2647
        %v2685 = vadd.f32 %v2407, %v2650
        %v2686 = vadd.f32 %v2408, %v2653
        %v2688 = vperm.slane %v245, 0
        %v2690 = vadd.f32 %v2655, %v2688
        %v2691 = vadd.f32 %v2656, %v2688
        %v2692 = vadd.f32 %v2657, %v2688
        %v2693 = vadd.f32 %v2658, %v2688
        %v2694 = vadd.f32 %v2659, %v2688
        %v2695 = vadd.f32 %v2660, %v2688
        %v2696 = vadd.f32 %v2661, %v2688
        %v2697 = vadd.f32 %v2662, %v2688
        %v2698 = vadd.f32 %v2663, %v2688
        %v2699 = vadd.f32 %v2664, %v2688
        %v2700 = vadd.f32 %v2665, %v2688
        %v2701 = vadd.f32 %v2666, %v2688
        %v2702 = vadd.f32 %v2667, %v2688
        %v2703 = vadd.f32 %v2668, %v2688
        %v2704 = vadd.f32 %v2669, %v2688
        %v2705 = vadd.f32 %v2670, %v2688
        %v2706 = vadd.f32 %v2671, %v2688
        %v2707 = vadd.f32 %v2672, %v2688
        %v2708 = vadd.f32 %v2673, %v2688
        %v2709 = vadd.f32 %v2674, %v2688
        %v2710 = vadd.f32 %v2675, %v2688
        %v2711 = vadd.f32 %v2676, %v2688
        %v2712 = vadd.f32 %v2677, %v2688
        %v2713 = vadd.f32 %v2678, %v2688
        %v2714 = vadd.f32 %v2679, %v2688
        %v2715 = vadd.f32 %v2680, %v2688
        %v2716 = vadd.f32 %v2681, %v2688
        %v2717 = vadd.f32 %v2682, %v2688
        %v2718 = vadd.f32 %v2683, %v2688
        %v2719 = vadd.f32 %v2684, %v2688
        %v2720 = vadd.f32 %v2685, %v2688
        %v2721 = vadd.f32 %v2686, %v2688
        %vm2722 = vcmask 64512
        %2723 = vst.msk [vmem:[%s243] sm:$0xff] %vm2722, %v2690
        %2724 = vst.msk [vmem:[%s243 + $0x8] sm:$0xff] %vm2722, %v2691
        %2725 = vst.msk [vmem:[%s243 + $0x10] sm:$0xff] %vm2722, %v2692
        %2726 = vst.msk [vmem:[%s243 + $0x18] sm:$0xff] %vm2722, %v2693
        %2727 = vst.msk [vmem:[%s243 + $0x20] sm:$0xff] %vm2722, %v2694
        %2728 = vst.msk [vmem:[%s243 + $0x28] sm:$0xff] %vm2722, %v2695
        %2729 = vst.msk [vmem:[%s243 + $0x30] sm:$0xff] %vm2722, %v2696
        %2730 = vst.msk [vmem:[%s243 + $0x38] sm:$0xff] %vm2722, %v2697
        %2731 = vst.msk [vmem:[%s243 + $0x40] sm:$0xff] %vm2722, %v2698
        %2732 = vst.msk [vmem:[%s243 + $0x48] sm:$0xff] %vm2722, %v2699
        %2733 = vst.msk [vmem:[%s243 + $0x50] sm:$0xff] %vm2722, %v2700
        %2734 = vst.msk [vmem:[%s243 + $0x58] sm:$0xff] %vm2722, %v2701
        %2735 = vst.msk [vmem:[%s243 + $0x60] sm:$0xff] %vm2722, %v2702
        %2736 = vst.msk [vmem:[%s243 + $0x68] sm:$0xff] %vm2722, %v2703
        %2737 = vst.msk [vmem:[%s243 + $0x70] sm:$0xff] %vm2722, %v2704
        %2738 = vst.msk [vmem:[%s243 + $0x78] sm:$0xff] %vm2722, %v2705
        %2739 = vst.msk [vmem:[%s243 + $0x80] sm:$0xff] %vm2722, %v2706
        %2740 = vst.msk [vmem:[%s243 + $0x88] sm:$0xff] %vm2722, %v2707
        %2741 = vst.msk [vmem:[%s243 + $0x90] sm:$0xff] %vm2722, %v2708
        %2742 = vst.msk [vmem:[%s243 + $0x98] sm:$0xff] %vm2722, %v2709
        %2743 = vst.msk [vmem:[%s243 + $0xa0] sm:$0xff] %vm2722, %v2710
        %2744 = vst.msk [vmem:[%s243 + $0xa8] sm:$0xff] %vm2722, %v2711
        %2745 = vst.msk [vmem:[%s243 + $0xb0] sm:$0xff] %vm2722, %v2712
        %2746 = vst.msk [vmem:[%s243 + $0xb8] sm:$0xff] %vm2722, %v2713
        %2747 = vst.msk [vmem:[%s243 + $0xc0] sm:$0xff] %vm2722, %v2714
        %2748 = vst.msk [vmem:[%s243 + $0xc8] sm:$0xff] %vm2722, %v2715
        %2749 = vst.msk [vmem:[%s243 + $0xd0] sm:$0xff] %vm2722, %v2716
        %2750 = vst.msk [vmem:[%s243 + $0xd8] sm:$0xff] %vm2722, %v2717
        %2751 = vst.msk [vmem:[%s243 + $0xe0] sm:$0xff] %vm2722, %v2718
        %2752 = vst.msk [vmem:[%s243 + $0xe8] sm:$0xff] %vm2722, %v2719
        %2753 = vst.msk [vmem:[%s243 + $0xf0] sm:$0xff] %vm2722, %v2720
        %2754 = vst.msk [vmem:[%s243 + $0xf8] sm:$0xff] %vm2722, %v2721
        %v2755 = vsel %vm2722, %v2690, 0.0
        %v2756 = vsel %vm2722, %v2691, 0.0
        %v2757 = vadd.f32 %v2755, %v2756
        %v2758 = vsel %vm2722, %v2692, 0.0
        %v2759 = vadd.f32 %v2757, %v2758
        %v2760 = vsel %vm2722, %v2693, 0.0
        %v2761 = vadd.f32 %v2759, %v2760
        %v2762 = vsel %vm2722, %v2694, 0.0
        %v2763 = vadd.f32 %v2761, %v2762
        %v2764 = vsel %vm2722, %v2695, 0.0
        %v2765 = vadd.f32 %v2763, %v2764
        %v2766 = vsel %vm2722, %v2696, 0.0
        %v2767 = vadd.f32 %v2765, %v2766
        %v2768 = vsel %vm2722, %v2697, 0.0
        %v2769 = vadd.f32 %v2767, %v2768
        %v2770 = vsel %vm2722, %v2698, 0.0
        %v2771 = vadd.f32 %v2769, %v2770
        %v2772 = vsel %vm2722, %v2699, 0.0
        %v2773 = vadd.f32 %v2771, %v2772
        %v2774 = vsel %vm2722, %v2700, 0.0
        %v2775 = vadd.f32 %v2773, %v2774
        %v2776 = vsel %vm2722, %v2701, 0.0
        %v2777 = vadd.f32 %v2775, %v2776
        %v2778 = vsel %vm2722, %v2702, 0.0
        %v2779 = vadd.f32 %v2777, %v2778
        %v2780 = vsel %vm2722, %v2703, 0.0
        %v2781 = vadd.f32 %v2779, %v2780
        %v2782 = vsel %vm2722, %v2704, 0.0
        %v2783 = vadd.f32 %v2781, %v2782
        %v2784 = vsel %vm2722, %v2705, 0.0
        %v2785 = vadd.f32 %v2783, %v2784
        %v2786 = vsel %vm2722, %v2706, 0.0
        %v2787 = vadd.f32 %v2785, %v2786
        %v2788 = vsel %vm2722, %v2707, 0.0
        %v2789 = vadd.f32 %v2787, %v2788
        %v2790 = vsel %vm2722, %v2708, 0.0
        %v2791 = vadd.f32 %v2789, %v2790
        %v2792 = vsel %vm2722, %v2709, 0.0
        %v2793 = vadd.f32 %v2791, %v2792
        %v2794 = vsel %vm2722, %v2710, 0.0
        %v2795 = vadd.f32 %v2793, %v2794
        %v2796 = vsel %vm2722, %v2711, 0.0
        %v2797 = vadd.f32 %v2795, %v2796
        %v2798 = vsel %vm2722, %v2712, 0.0
        %v2799 = vadd.f32 %v2797, %v2798
        %v2800 = vsel %vm2722, %v2713, 0.0
        %v2801 = vadd.f32 %v2799, %v2800
        %v2802 = vsel %vm2722, %v2714, 0.0
        %v2803 = vadd.f32 %v2801, %v2802
        %v2804 = vsel %vm2722, %v2715, 0.0
        %v2805 = vadd.f32 %v2803, %v2804
        %v2806 = vsel %vm2722, %v2716, 0.0
        %v2807 = vadd.f32 %v2805, %v2806
        %v2808 = vsel %vm2722, %v2717, 0.0
        %v2809 = vadd.f32 %v2807, %v2808
        %v2810 = vsel %vm2722, %v2718, 0.0
        %v2811 = vadd.f32 %v2809, %v2810
        %v2812 = vsel %vm2722, %v2719, 0.0
        %v2813 = vadd.f32 %v2811, %v2812
        %v2814 = vsel %vm2722, %v2720, 0.0
        %v2815 = vadd.f32 %v2813, %v2814
        %v2816 = vsel %vm2722, %v2721, 0.0
        %v2817 = vadd.f32 %v2815, %v2816
        %v2818 = vrot.slane %v2817, 4
        %v2819 = vadd.f32 %v2817, %v2818
        %v2820 = vrot.slane %v2819, 2
        %v2821 = vadd.f32 %v2819, %v2820
        %v2822 = vrot.slane %v2821, 1
        %v2823 = vadd.f32 %v2821, %v2822
        %v2824 = vmul.f32 %v2823, 0.00390625
        %v2825 = vsub.f32 %v2690, %v2824
        %v2826 = vsub.f32 %v2691, %v2824
        %v2827 = vsub.f32 %v2692, %v2824
        %v2828 = vsub.f32 %v2693, %v2824
        %v2829 = vsub.f32 %v2694, %v2824
        %v2830 = vsub.f32 %v2695, %v2824
        %v2831 = vsub.f32 %v2696, %v2824
        %v2832 = vsub.f32 %v2697, %v2824
        %v2833 = vsub.f32 %v2698, %v2824
        %v2834 = vsub.f32 %v2699, %v2824
        %v2835 = vsub.f32 %v2700, %v2824
        %v2836 = vsub.f32 %v2701, %v2824
        %v2837 = vsub.f32 %v2702, %v2824
        %v2838 = vsub.f32 %v2703, %v2824
        %v2839 = vsub.f32 %v2704, %v2824
        %v2840 = vsub.f32 %v2705, %v2824
        %v2841 = vsub.f32 %v2706, %v2824
        %v2842 = vsub.f32 %v2707, %v2824
        %v2843 = vsub.f32 %v2708, %v2824
        %v2844 = vsub.f32 %v2709, %v2824
        %v2845 = vsub.f32 %v2710, %v2824
        %v2846 = vsub.f32 %v2711, %v2824
        %v2847 = vsub.f32 %v2712, %v2824
        %v2848 = vsub.f32 %v2713, %v2824
        %v2849 = vsub.f32 %v2714, %v2824
        %v2850 = vsub.f32 %v2715, %v2824
        %v2851 = vsub.f32 %v2716, %v2824
        %v2852 = vsub.f32 %v2717, %v2824
        %v2853 = vsub.f32 %v2718, %v2824
        %v2854 = vsub.f32 %v2719, %v2824
        %v2855 = vsub.f32 %v2720, %v2824
        %v2856 = vsub.f32 %v2721, %v2824
        %v2857 = vmul.f32 %v2825, %v2825
        %v2858 = vmul.f32 %v2826, %v2826
        %v2859 = vmul.f32 %v2827, %v2827
        %v2860 = vmul.f32 %v2828, %v2828
        %v2861 = vmul.f32 %v2829, %v2829
        %v2862 = vmul.f32 %v2830, %v2830
        %v2863 = vmul.f32 %v2831, %v2831
        %v2864 = vmul.f32 %v2832, %v2832
        %v2865 = vmul.f32 %v2833, %v2833
        %v2866 = vmul.f32 %v2834, %v2834
        %v2867 = vmul.f32 %v2835, %v2835
        %v2868 = vmul.f32 %v2836, %v2836
        %v2869 = vmul.f32 %v2837, %v2837
        %v2870 = vmul.f32 %v2838, %v2838
        %v2871 = vmul.f32 %v2839, %v2839
        %v2872 = vmul.f32 %v2840, %v2840
        %v2873 = vmul.f32 %v2841, %v2841
        %v2874 = vmul.f32 %v2842, %v2842
        %v2875 = vmul.f32 %v2843, %v2843
        %v2876 = vmul.f32 %v2844, %v2844
        %v2877 = vmul.f32 %v2845, %v2845
        %v2878 = vmul.f32 %v2846, %v2846
        %v2879 = vmul.f32 %v2847, %v2847
        %v2880 = vmul.f32 %v2848, %v2848
        %v2881 = vmul.f32 %v2849, %v2849
        %v2882 = vmul.f32 %v2850, %v2850
        %v2883 = vmul.f32 %v2851, %v2851
        %v2884 = vmul.f32 %v2852, %v2852
        %v2885 = vmul.f32 %v2853, %v2853
        %v2886 = vmul.f32 %v2854, %v2854
        %v2887 = vmul.f32 %v2855, %v2855
        %v2888 = vmul.f32 %v2856, %v2856
        %v2889 = vsel %vm2722, %v2857, 0.0
        %v2890 = vsel %vm2722, %v2858, 0.0
        %v2891 = vadd.f32 %v2889, %v2890
        %v2892 = vsel %vm2722, %v2859, 0.0
        %v2893 = vadd.f32 %v2891, %v2892
        %v2894 = vsel %vm2722, %v2860, 0.0
        %v2895 = vadd.f32 %v2893, %v2894
        %v2896 = vsel %vm2722, %v2861, 0.0
        %v2897 = vadd.f32 %v2895, %v2896
        %v2898 = vsel %vm2722, %v2862, 0.0
        %v2899 = vadd.f32 %v2897, %v2898
        %v2900 = vsel %vm2722, %v2863, 0.0
        %v2901 = vadd.f32 %v2899, %v2900
        %v2902 = vsel %vm2722, %v2864, 0.0
        %v2903 = vadd.f32 %v2901, %v2902
        %v2904 = vsel %vm2722, %v2865, 0.0
        %v2905 = vadd.f32 %v2903, %v2904
        %v2906 = vsel %vm2722, %v2866, 0.0
        %v2907 = vadd.f32 %v2905, %v2906
        %v2908 = vsel %vm2722, %v2867, 0.0
        %v2909 = vadd.f32 %v2907, %v2908
        %v2910 = vsel %vm2722, %v2868, 0.0
        %v2911 = vadd.f32 %v2909, %v2910
        %v2912 = vsel %vm2722, %v2869, 0.0
        %v2913 = vadd.f32 %v2911, %v2912
        %v2914 = vsel %vm2722, %v2870, 0.0
        %v2915 = vadd.f32 %v2913, %v2914
        %v2916 = vsel %vm2722, %v2871, 0.0
        %v2917 = vadd.f32 %v2915, %v2916
        %v2918 = vsel %vm2722, %v2872, 0.0
        %v2919 = vadd.f32 %v2917, %v2918
        %v2920 = vsel %vm2722, %v2873, 0.0
        %v2921 = vadd.f32 %v2919, %v2920
        %v2922 = vsel %vm2722, %v2874, 0.0
        %v2923 = vadd.f32 %v2921, %v2922
        %v2924 = vsel %vm2722, %v2875, 0.0
        %v2925 = vadd.f32 %v2923, %v2924
        %v2926 = vsel %vm2722, %v2876, 0.0
        %v2927 = vadd.f32 %v2925, %v2926
        %v2928 = vsel %vm2722, %v2877, 0.0
        %v2929 = vadd.f32 %v2927, %v2928
        %v2930 = vsel %vm2722, %v2878, 0.0
        %v2931 = vadd.f32 %v2929, %v2930
        %v2932 = vsel %vm2722, %v2879, 0.0
        %v2933 = vadd.f32 %v2931, %v2932
        %v2934 = vsel %vm2722, %v2880, 0.0
        %v2935 = vadd.f32 %v2933, %v2934
        %v2936 = vsel %vm2722, %v2881, 0.0
        %v2937 = vadd.f32 %v2935, %v2936
        %v2938 = vsel %vm2722, %v2882, 0.0
        %v2939 = vadd.f32 %v2937, %v2938
        %v2940 = vsel %vm2722, %v2883, 0.0
        %v2941 = vadd.f32 %v2939, %v2940
        %v2942 = vsel %vm2722, %v2884, 0.0
        %v2943 = vadd.f32 %v2941, %v2942
        %v2944 = vsel %vm2722, %v2885, 0.0
        %v2945 = vadd.f32 %v2943, %v2944
        %v2946 = vsel %vm2722, %v2886, 0.0
        %v2947 = vadd.f32 %v2945, %v2946
        %v2948 = vsel %vm2722, %v2887, 0.0
        %v2949 = vadd.f32 %v2947, %v2948
        %v2950 = vsel %vm2722, %v2888, 0.0
        %v2951 = vadd.f32 %v2949, %v2950
        %v2952 = vrot.slane %v2951, 4
        %v2953 = vadd.f32 %v2951, %v2952
        %v2954 = vrot.slane %v2953, 2
        %v2955 = vadd.f32 %v2953, %v2954
        %v2956 = vrot.slane %v2955, 1
        %v2957 = vadd.f32 %v2955, %v2956
        %vm2958 = vcmask 57344
        %2959 = vst.msk [vmem:[%s227] sm:$0x1] %vm2958, %v2823
        %2960 = vst.msk [vmem:[%s233] sm:$0x1] %vm2958, %v2957
        %s2961 = smul.u32 32, %s23
        %p2962 = scmp.lt.s32.totalorder %s2961, 63
        %s2963 = scalar_select %p2962, %s2961, 63
        %s2964 = smul.addr %s2963, 8
        %s2965 = scalar_lea.vmem %s3, %s2964
        %s2966 = sand.u32 %s125, 1
        %s2967 = scalar_lea.sflag [#allocation3], %s2966
        %s2968 = sand.u32 %s125, 1
        %s2969 = scalar_lea.vmem [#allocation2], %s2968
        %s2970 = sand.u32 %s151, 1
        %s2971 = scalar_lea.sflag [#allocation5], %s2970
        %s2972 = sand.u32 %s151, 1
        %s2973 = scalar_lea.vmem [#allocation4], %s2972
        // Predicated region
        $region33: #{tpu_custom_call.1} parent=31 // pred_check
          %p2974 = pneg %p109
        $region34: #{tpu_custom_call.1} parent=31 // pred_check_branch
          %2976 = sbr.rel (%p2974) target = $region36
        $region35: #{tpu_custom_call.1} parent=31 // pred_region
          %s2977 = smul.u32 32, %s23
        $region36: #{tpu_custom_call.1} parent=31 // pred_fallthru
          _
        // Predicated region
        $region37: #{tpu_custom_call.1} parent=31 // pred_check
          %p2978 = pneg %p135
        $region38: #{tpu_custom_call.1} parent=31 // pred_check_branch
          %2980 = sbr.rel (%p2978) target = $region40
        $region39: #{tpu_custom_call.1} parent=31 // pred_region
          %2982 = vsyncadd %s2967, 0
          %s2983 = scalar_lea.hbm %s4, %s23
          %s2985 = sshll.u32 %s2969, 4
          %s2986 = int_to_ptr.vmem [resolvable:$true] %s2985
          %s2987 = sshll.u32 %s2983, 4
          %s2988 = int_to_ptr.hbm [resolvable:$true] %s2987
          %2990 = dma.vmem_to_hbm [thread:$0]  %s2986, 16, %s2988, %s2967
        $region40: #{tpu_custom_call.1} parent=31 // pred_fallthru
          _
        // Predicated region
        $region41: #{tpu_custom_call.1} parent=31 // pred_check
          %p2991 = pneg %p161
        $region42: #{tpu_custom_call.1} parent=31 // pred_check_branch
          %2993 = sbr.rel (%p2991) target = $region44
        $region43: #{tpu_custom_call.1} parent=31 // pred_region
          %2995 = vsyncadd %s2971, 0
          %s2996 = scalar_lea.hbm %s5, %s23
          %s2998 = sshll.u32 %s2973, 4
          %s2999 = int_to_ptr.vmem [resolvable:$true] %s2998
          %s3000 = sshll.u32 %s2996, 4
          %s3001 = int_to_ptr.hbm [resolvable:$true] %s3000
          %3003 = dma.vmem_to_hbm [thread:$0]  %s2999, 16, %s3001, %s2971
        $region44: #{tpu_custom_call.1} parent=31 // pred_fallthru
          _
      $region32: #{tpu_custom_call.1} parent=5 // pred_fallthru
        _
      %p3004 = scmp.le.s32.totalorder 2, %s18
      // Predicated region
      $region45: #{tpu_custom_call.1} parent=5 // pred_check
        %p3005 = pneg %p3004
      $region46: #{tpu_custom_call.1} parent=5 // pred_check_branch
        %3007 = sbr.rel (%p3005) target = $region48
      $region47: #{tpu_custom_call.1} parent=5 // pred_region
        %s3008 = ssub.s32 %s18, 2
        // Predicated region
        $region49: #{tpu_custom_call.1} parent=47 // pred_check
          %p3009 = pneg %p115
        $region50: #{tpu_custom_call.1} parent=47 // pred_check_branch
          %3011 = sbr.rel (%p3009) target = $region52
        $region51: #{tpu_custom_call.1} parent=47 // pred_region
          %s3012 = smul.u32 32, %s24
          %p3013 = scmp.lt.s32.totalorder %s3012, 63
          %s3014 = scalar_select %p3013, %s3012, 63
          %s3015 = smul.addr %s3014, 8
          %s3016 = scalar_lea.vmem %s3, %s3015
        $region52: #{tpu_custom_call.1} parent=47 // pred_fallthru
          _
        // Predicated region
        $region53: #{tpu_custom_call.1} parent=47 // pred_check
          %p3017 = pneg %p141
        $region54: #{tpu_custom_call.1} parent=47 // pred_check_branch
          %3019 = sbr.rel (%p3017) target = $region56
        $region55: #{tpu_custom_call.1} parent=47 // pred_region
          %s3020 = sand.u32 %s126, 1
          %s3021 = scalar_lea.sflag [#allocation3], %s3020
          %s3022 = sand.u32 %s126, 1
          %s3023 = scalar_lea.vmem [#allocation2], %s3022
          %3025 = dma.done %s3021, 16
        $region56: #{tpu_custom_call.1} parent=47 // pred_fallthru
          _
        // Predicated region
        $region57: #{tpu_custom_call.1} parent=47 // pred_check
          %p3026 = pneg %p167
        $region58: #{tpu_custom_call.1} parent=47 // pred_check_branch
          %3028 = sbr.rel (%p3026) target = $region60
        $region59: #{tpu_custom_call.1} parent=47 // pred_region
          %s3029 = sand.u32 %s152, 1
          %s3030 = scalar_lea.sflag [#allocation5], %s3029
          %s3031 = sand.u32 %s152, 1
          %s3032 = scalar_lea.vmem [#allocation4], %s3031
          %3034 = dma.done %s3030, 16
        $region60: #{tpu_custom_call.1} parent=47 // pred_fallthru
          _
      $region48: #{tpu_custom_call.1} parent=5 // pred_fallthru
        _
    $region6: #{tpu_custom_call.1} parent=1 // loop_footer
      %s22 = sadd.s32 1, %s18
    $region7: #{tpu_custom_call.1} parent=1 // loop_footer_branch
      %17 = sbr.rel target = $region3
    $region8: #{tpu_custom_call.1} parent=1 // loop_exit
      _
    %3035 = vsyncpa [#allocation3], 1
    %s3036 = scalar_lea.sflag [#allocation3], 1
    %3037 = vsyncpa %s3036, 1
    %3038 = vsyncpa [#allocation5], 1
    %s3039 = scalar_lea.sflag [#allocation5], 1
    %3040 = vsyncpa %s3039, 1

</llo_original>
